<compile_context>
chip_gen: v7x
topology: tpu7x:2x2x1
jax: 0.10.0
libtpu: 0.0.40
codegen_flags: <defaults>
</compile_context>

<pallas_src>
import functools

import jax
import jax.numpy as jnp
from jax import lax
from jax.experimental import pallas as pl
from jax.experimental.pallas import tpu as pltpu


_LN_EPS = 1e-5  # torch.nn.LayerNorm default


# ---------------------------------------------------------------------------
# Generation-aware VMEM budget and tile sizing
# ---------------------------------------------------------------------------
@functools.lru_cache(maxsize=None)
def _vmem_limit_bytes():
    """Scoped-VMEM limit with headroom for Mosaic's internal scratch."""
    default = 64 * 1024 * 1024
    try:
        info = pltpu.get_tpu_info()
        cap = getattr(info, "vmem_capacity_bytes", None)
        if not cap:
            return default
        # leave ~16 MiB headroom; cap at 100 MiB on 128-MiB parts.
        return int(min(100 * 1024 * 1024,
                       max(32 * 1024 * 1024, int(cap) - 16 * 1024 * 1024)))
    except Exception:
        return default


def _choose_tm(tokens, cap):
    """Token-tile size: whole array if small, else a 128-multiple tile."""
    cap = max(128, (int(cap) // 128) * 128)
    if tokens <= cap:
        return tokens
    for tm in (1024, 512, 256, 128):
        if tm <= cap and tokens % tm == 0:
            return tm
    # Ragged last tile (cdiv grid): padded rows are row-local garbage that is
    # dropped on the masked write — safe because nothing reduces across rows.
    return min(cap, 256)


def _mlp_token_cap(d, h, itemsize, budget):
    """Largest token tile for the LN+MLP kernel that fits the VMEM budget."""
    # Constant-index weight blocks are still double-buffered by the pipeline.
    resident = 2 * itemsize * (2 * d * h + 3 * d + h)
    avail = budget - resident - (4 << 20)
    if avail <= 0:
        return 128
    per_row = 4 * d * itemsize + 4 * (h + 2 * d)   # in/out tiles + f32 temps
    return int(max(128, min(1024, avail // per_row)))


def _attn_q_cap(d, c, nk, itemsize, budget):
    """Largest query tile for the fused attention kernel."""
    resident = (2 * itemsize * (nk * d + 3 * d * c + c * c + 2 * d + c)
                + 4 * nk * 2 * c)                  # + f32 K|V intermediate
    avail = budget - resident - (4 << 20)
    if avail <= 0:
        return 128
    per_row = 4 * d * itemsize + 4 * (nk + 3 * c)  # q/out tiles + f32 temps
    return int(max(128, min(1024, avail // per_row)))


def _layer_norm_f32(x, gamma, beta, eps=_LN_EPS):
    """LayerNorm over the last dim, statistics in f32 (returns f32)."""
    xf = x.astype(jnp.float32)
    mu = jnp.mean(xf, axis=-1, keepdims=True)
    var = jnp.mean(jnp.square(xf - mu), axis=-1, keepdims=True)
    return ((xf - mu) * lax.rsqrt(var + eps)
            * gamma.astype(jnp.float32) + beta.astype(jnp.float32))


# ---------------------------------------------------------------------------
# Kernel 1: fused  norm_v + K|V proj + norm_q + Q proj + attention
#           + output projection + residual   (one pallas_call per layer)
# ---------------------------------------------------------------------------
def _decoder_attn_kernel(q_ref, gq_ref, bq_ref, wq_ref,
                         v_ref, gv_ref, bv_ref, wkv_ref,
                         wp_ref, bp_ref, o_ref, attn_scratch,
                         *, num_heads, scale):
    q_in = q_ref[...]                               # (TQ, D)
    q_res = q_in.astype(jnp.float32)

    # Fused norm_v + K/V projection: one (D, 2C) matmul fills the MXU better
    # than two (D, C) ones and keeps K/V entirely in VMEM (no HBM round trip).
    vn = _layer_norm_f32(v_ref[...], gv_ref[...], bv_ref[...]).astype(v_ref.dtype)
    kv = jnp.dot(vn, wkv_ref[...],
                 preferred_element_type=jnp.float32).astype(v_ref.dtype)  # (NK, 2C)

    # norm_q + Q projection with the softmax scale folded in once.
    qn = _layer_norm_f32(q_in, gq_ref[...], bq_ref[...]).astype(q_in.dtype)
    qp = (jnp.dot(qn, wq_ref[...], preferred_element_type=jnp.float32)
          * scale).astype(q_in.dtype)                                     # (TQ, C)

    n_q, c = qp.shape
    hd = c // num_heads

    for h in range(num_heads):                      # static unroll over heads
        lo = h * hd
        qh = qp[:, lo:lo + hd]
        kh = kv[:, lo:lo + hd]
        vh = kv[:, c + lo:c + lo + hd]
        # scores = qh @ kh^T (contract head dim, no explicit transpose)
        s = lax.dot_general(qh, kh, (((1,), (1,)), ((), ())),
                            preferred_element_type=jnp.float32)           # (TQ, NK)
        s = s - jnp.max(s, axis=-1, keepdims=True)
        p = jnp.exp(s)
        # Deferred softmax normalization: scale the small (TQ, hd) PV result
        # instead of dividing the (TQ, NK) probabilities.
        inv = 1.0 / jnp.sum(p, axis=-1, keepdims=True)
        oh = jnp.dot(p.astype(vh.dtype), vh,
                     preferred_element_type=jnp.float32) * inv            # (TQ, hd)
        attn_scratch[:, lo:lo + hd] = oh

    # Single full-contraction-depth output projection.
    proj = jnp.dot(attn_scratch[...].astype(wp_ref.dtype), wp_ref[...],
                   preferred_element_type=jnp.float32)
    proj = proj + bp_ref[...].astype(jnp.float32)
    o_ref[...] = (q_res + proj).astype(o_ref.dtype)                        # residual


def cross_attn_pallas(q, gq, bq, wq, v, gv, bv, wkv, wp, bp,
                      *, num_heads, scale):
    B, N, D = q.shape
    NK = v.shape[1]
    C = wq.shape[1]
    itemsize = jnp.dtype(q.dtype).itemsize
    budget = _vmem_limit_bytes()
    tq = _choose_tm(N, _attn_q_cap(D, C, NK, itemsize, budget))

    kernel = functools.partial(_decoder_attn_kernel,
                               num_heads=num_heads, scale=scale)
    return pl.pallas_call(
        kernel,
        out_shape=jax.ShapeDtypeStruct((B, N, D), q.dtype),
        grid=(B, pl.cdiv(N, tq)),
        in_specs=[
            pl.BlockSpec((None, tq, D), lambda b, i: (b, i, 0)),   # q tile
            pl.BlockSpec((1, D), lambda b, i: (0, 0)),             # norm_q gamma
            pl.BlockSpec((1, D), lambda b, i: (0, 0)),             # norm_q beta
            pl.BlockSpec((D, C), lambda b, i: (0, 0)),             # Wq (resident)
            pl.BlockSpec((None, NK, D), lambda b, i: (b, 0, 0)),   # v (resident per batch)
            pl.BlockSpec((1, D), lambda b, i: (0, 0)),             # norm_v gamma
            pl.BlockSpec((1, D), lambda b, i: (0, 0)),             # norm_v beta
            pl.BlockSpec((D, 2 * C), lambda b, i: (0, 0)),         # Wk|Wv fused (resident)
            pl.BlockSpec((C, C), lambda b, i: (0, 0)),             # Wproj (resident)
            pl.BlockSpec((1, C), lambda b, i: (0, 0)),             # bproj
        ],
        out_specs=pl.BlockSpec((None, tq, D), lambda b, i: (b, i, 0)),
        scratch_shapes=[pltpu.VMEM((tq, C), jnp.float32)],
        compiler_params=pltpu.CompilerParams(
            dimension_semantics=("parallel", "parallel"),
            vmem_limit_bytes=budget),
    )(q, gq, bq, wq, v, gv, bv, wkv, wp, bp)


# ---------------------------------------------------------------------------
# Kernel 2: fused  norm2 + fc1 + GELU(exact) + fc2 + residual,
#           token-tiled grid with resident weights.
# ---------------------------------------------------------------------------
def _mlp_block_kernel(x_ref, g_ref, b_ref, w1_ref, b1_ref, w2_ref, b2_ref,
                      o_ref):
    x_f32 = x_ref[...].astype(jnp.float32)
    xn = _layer_norm_f32(x_ref[...], g_ref[...], b_ref[...])
    # fc1 (native-dtype operands, f32 accumulation)
    h = jnp.dot(xn.astype(x_ref.dtype), w1_ref[...],
                preferred_element_type=jnp.float32)
    h = h + b1_ref[...].astype(jnp.float32)
    # exact (erf) GELU — matches torch.nn.GELU default
    h = 0.5 * h * (1.0 + lax.erf(h * 0.7071067811865476))
    # fc2
    y = jnp.dot(h.astype(w2_ref.dtype), w2_ref[...],
                preferred_element_type=jnp.float32)
    y = y + b2_ref[...].astype(jnp.float32)
    o_ref[...] = (x_f32 + y).astype(o_ref.dtype)              # residual add


def mlp_block_pallas(x, gamma, beta, w1, b1, w2, b2):
    orig_shape = x.shape
    D = orig_shape[-1]
    H = w1.shape[1]
    x2d = x.reshape(-1, D)
    T = x2d.shape[0]
    itemsize = jnp.dtype(x.dtype).itemsize
    budget = _vmem_limit_bytes()
    tm = _choose_tm(T, _mlp_token_cap(D, H, itemsize, budget))
    out = pl.pallas_call(
        _mlp_block_kernel,
        out_shape=jax.ShapeDtypeStruct((T, D), x.dtype),
        grid=(pl.cdiv(T, tm),),
        in_specs=[
            pl.BlockSpec((tm, D), lambda i: (i, 0)),   # activation tile
            pl.BlockSpec((1, D), lambda i: (0, 0)),    # norm2 gamma (resident)
            pl.BlockSpec((1, D), lambda i: (0, 0)),    # norm2 beta
            pl.BlockSpec((D, H), lambda i: (0, 0)),    # W1 (resident)
            pl.BlockSpec((1, H), lambda i: (0, 0)),    # b1
            pl.BlockSpec((H, D), lambda i: (0, 0)),    # W2 (resident)
            pl.BlockSpec((1, D), lambda i: (0, 0)),    # b2
        ],
        out_specs=pl.BlockSpec((tm, D), lambda i: (i, 0)),
        compiler_params=pltpu.CompilerParams(
            dimension_semantics=("parallel",),
            vmem_limit_bytes=budget),
    )(x2d, gamma, beta, w1, b1, w2, b2)
    return out.reshape(orig_shape)


# ---------------------------------------------------------------------------
# decoder_fuser forward
# ---------------------------------------------------------------------------
def decoder_fuser_pallas(q, v, params, *, num_heads):
    for p in params:
        head_dim = p["wq"].shape[1] // num_heads
        scale = head_dim ** (-0.5)
        wkv = jnp.concatenate([p["wk"], p["wv"]], axis=1)     # (D, 2C)
        q = cross_attn_pallas(
            q, p["norm_q_g"], p["norm_q_b"], p["wq"],
            v, p["norm_v_g"], p["norm_v_b"], wkv,
            p["wp"], p["bp"], num_heads=num_heads, scale=scale)
        q = mlp_block_pallas(
            q, p["norm2_g"], p["norm2_b"], p["w1"], p["b1"], p["w2"], p["b2"])
    return q


# ---------------------------------------------------------------------------
# Parameters (nn.Linear weights stored pre-transposed: (in, out))
# ---------------------------------------------------------------------------
def init_decoder_params(key, dim, num_layers, mlp_ratio=4.0,
                        dtype=jnp.float32):
    hidden = int(dim * mlp_ratio)

    def u(k, shape, fan_in):
        bound = 1.0 / (fan_in ** 0.5)
        return jax.random.uniform(k, shape, dtype, minval=-bound, maxval=bound)

    params = []
    for _ in range(num_layers):
        key, *ks = jax.random.split(key, 16)
        params.append(dict(
            norm_q_g=1.0 + 0.1 * jax.random.normal(ks[0], (1, dim), dtype),
            norm_q_b=0.1 * jax.random.normal(ks[1], (1, dim), dtype),
            norm_v_g=1.0 + 0.1 * jax.random.normal(ks[2], (1, dim), dtype),
            norm_v_b=0.1 * jax.random.normal(ks[3], (1, dim), dtype),
            wq=u(ks[4], (dim, dim), dim),
            wk=u(ks[5], (dim, dim), dim),
            wv=u(ks[6], (dim, dim), dim),
            wp=u(ks[7], (dim, dim), dim),
            bp=u(ks[8], (1, dim), dim),
            norm2_g=1.0 + 0.1 * jax.random.normal(ks[9], (1, dim), dtype),
            norm2_b=0.1 * jax.random.normal(ks[10], (1, dim), dtype),
            w1=u(ks[11], (dim, hidden), dim),
            b1=u(ks[12], (1, hidden), dim),
            w2=u(ks[13], (hidden, dim), hidden),
            b2=u(ks[14], (1, dim), hidden),
        ))
    return params


# ---------------------------------------------------------------------------
# Pure-JAX reference (mirrors the PyTorch forward exactly)
# ---------------------------------------------------------------------------
def _layernorm_ref(x, g, b, eps=_LN_EPS):
    mu = x.mean(-1, keepdims=True)
    var = ((x - mu) ** 2).mean(-1, keepdims=True)
    return (x - mu) / jnp.sqrt(var + eps) * g[0] + b[0]


def decoder_fuser_ref(q, v, params, *, num_heads):
    for p in params:
        B, N, D = q.shape
        NK = v.shape[1]
        C = p["wq"].shape[1]
        hd = C // num_heads
        scale = hd ** (-0.5)

        qn = _layernorm_ref(q, p["norm_q_g"], p["norm_q_b"])
        vn = _layernorm_ref(v, p["norm_v_g"], p["norm_v_b"])
        qh = (qn @ p["wq"]).reshape(B, N, num_heads, hd).transpose(0, 2, 1, 3)
        kh = (vn @ p["wk"]).reshape(B, NK, num_heads, hd).transpose(0, 2, 1, 3)
        vh = (vn @ p["wv"]).reshape(B, NK, num_heads, hd).transpose(0, 2, 1, 3)
        attn = jnp.einsum("bhnd,bhkd->bhnk", qh, kh) * scale
        attn = jax.nn.softmax(attn, axis=-1)
        x = jnp.einsum("bhnk,bhkd->bhnd", attn, vh)
        x = x.transpose(0, 2, 1, 3).reshape(B, N, C)
        q = q + (x @ p["wp"] + p["bp"][0])

        xn = _layernorm_ref(q, p["norm2_g"], p["norm2_b"])
        h = xn @ p["w1"] + p["b1"][0]
        h = 0.5 * h * (1.0 + lax.erf(h / jnp.sqrt(2.0)))
        q = q + (h @ p["w2"] + p["b2"][0])
    return q


if __name__ == "__main__":
    # Small ViT-decoder-like shapes: batch=2, queries=8, kv tokens=16,
    # dim=32, heads=4, layers=2 (mlp hidden = 128).
    B, N, NK, DIM, HEADS, LAYERS = 2, 8, 16, 32, 4, 2

    key = jax.random.PRNGKey(0)
    kq, kv, kp = jax.random.split(key, 3)
    q = jax.random.normal(kq, (B, N, DIM), jnp.float32)
    v = jax.random.normal(kv, (B, NK, DIM), jnp.float32)
    params = init_decoder_params(kp, DIM, LAYERS)

    run = jax.jit(functools.partial(decoder_fuser_pallas, num_heads=HEADS))
    out = jax.block_until_ready(run(q, v, params))

    ref = decoder_fuser_ref(q, v, params, num_heads=HEADS)
    assert out.shape == (B, N, DIM), out.shape
    max_err = float(jnp.max(jnp.abs(out - ref)))
    assert jnp.allclose(out, ref, atol=1e-3, rtol=1e-3), max_err

    print("KERNEL_OK")
</pallas_src>

<mosaic_0001>
module attributes {stable_mosaic.version = 11 : i64} {
  func.func @_decoder_attn_kernel(%arg0: i32, %arg1: i32, %arg2: memref<1x8x32xf32, #tpu.memory_space<vmem>>, %arg3: memref<1x32xf32, #tpu.memory_space<vmem>>, %arg4: memref<1x32xf32, #tpu.memory_space<vmem>>, %arg5: memref<32x32xf32, #tpu.memory_space<vmem>>, %arg6: memref<1x16x32xf32, #tpu.memory_space<vmem>>, %arg7: memref<1x32xf32, #tpu.memory_space<vmem>>, %arg8: memref<1x32xf32, #tpu.memory_space<vmem>>, %arg9: memref<32x64xf32, #tpu.memory_space<vmem>>, %arg10: memref<32x32xf32, #tpu.memory_space<vmem>>, %arg11: memref<1x32xf32, #tpu.memory_space<vmem>>, %arg12: memref<1x8x32xf32, #tpu.memory_space<vmem>>, %arg13: memref<8x32xf32, #tpu.memory_space<vmem>>) attributes {dimension_semantics = [#tpu.dimension_semantics<parallel>, #tpu.dimension_semantics<parallel>], iteration_bounds = array<i64: 2, 1>, scalar_prefetch = 0 : i64, scratch_operands = 1 : i64, tpu.core_type = #tpu.core_type<tc>, window_params = [{transform_indices = @transform_0, window_bounds = array<i64: 1, 8, 32>}, {pipeline_mode = #tpu.pipeline_mode<synchronous>, transform_indices = @transform_1, window_bounds = array<i64: 1, 32>}, {pipeline_mode = #tpu.pipeline_mode<synchronous>, transform_indices = @transform_2, window_bounds = array<i64: 1, 32>}, {pipeline_mode = #tpu.pipeline_mode<synchronous>, transform_indices = @transform_3, window_bounds = array<i64: 32, 32>}, {transform_indices = @transform_4, window_bounds = array<i64: 1, 16, 32>}, {pipeline_mode = #tpu.pipeline_mode<synchronous>, transform_indices = @transform_5, window_bounds = array<i64: 1, 32>}, {pipeline_mode = #tpu.pipeline_mode<synchronous>, transform_indices = @transform_6, window_bounds = array<i64: 1, 32>}, {pipeline_mode = #tpu.pipeline_mode<synchronous>, transform_indices = @transform_7, window_bounds = array<i64: 32, 64>}, {pipeline_mode = #tpu.pipeline_mode<synchronous>, transform_indices = @transform_8, window_bounds = array<i64: 32, 32>}, {pipeline_mode = #tpu.pipeline_mode<synchronous>, transform_indices = @transform_9, window_bounds = array<i64: 1, 32>}, {transform_indices = @transform_10, window_bounds = array<i64: 1, 8, 32>}]} {
    %c0 = arith.constant 0 : index
    %c0_0 = arith.constant 0 : index
    %c0_1 = arith.constant 0 : index
    %0 = vector.load %arg2[%c0, %c0_0, %c0_1] : memref<1x8x32xf32, #tpu.memory_space<vmem>>, vector<1x8x32xf32>
    %1 = vector.shape_cast %0 : vector<1x8x32xf32> to vector<8x32xf32>
    %c0_2 = arith.constant 0 : index
    %c0_3 = arith.constant 0 : index
    %c0_4 = arith.constant 0 : index
    %2 = vector.load %arg6[%c0_2, %c0_3, %c0_4] : memref<1x16x32xf32, #tpu.memory_space<vmem>>, vector<1x16x32xf32>
    %3 = vector.shape_cast %2 : vector<1x16x32xf32> to vector<16x32xf32>
    %c0_5 = arith.constant 0 : index
    %c0_6 = arith.constant 0 : index
    %4 = vector.load %arg7[%c0_5, %c0_6] : memref<1x32xf32, #tpu.memory_space<vmem>>, vector<1x32xf32>
    %c0_7 = arith.constant 0 : index
    %c0_8 = arith.constant 0 : index
    %5 = vector.load %arg8[%c0_7, %c0_8] : memref<1x32xf32, #tpu.memory_space<vmem>>, vector<1x32xf32>
    %cst = arith.constant dense<0.000000e+00> : vector<16xf32>
    %6 = vector.multi_reduction <add>, %3, %cst [1] : vector<16x32xf32> to vector<16xf32>
    %7 = vector.shape_cast %6 : vector<16xf32> to vector<16x1xf32>
    %cst_9 = arith.constant 3.200000e+01 : f32
    %8 = vector.broadcast %cst_9 : f32 to vector<16x1xf32>
    %9 = arith.divf %7, %8 : vector<16x1xf32>
    %10 = vector.broadcast %9 : vector<16x1xf32> to vector<16x32xf32>
    %11 = arith.subf %3, %10 : vector<16x32xf32>
    %12 = arith.mulf %11, %11 : vector<16x32xf32>
    %cst_10 = arith.constant dense<0.000000e+00> : vector<16xf32>
    %13 = vector.multi_reduction <add>, %12, %cst_10 [1] : vector<16x32xf32> to vector<16xf32>
    %14 = vector.shape_cast %13 : vector<16xf32> to vector<16x1xf32>
    %cst_11 = arith.constant 3.200000e+01 : f32
    %15 = vector.broadcast %cst_11 : f32 to vector<16x1xf32>
    %16 = arith.divf %14, %15 : vector<16x1xf32>
    %17 = vector.broadcast %9 : vector<16x1xf32> to vector<16x32xf32>
    %18 = arith.subf %3, %17 : vector<16x32xf32>
    %cst_12 = arith.constant 9.99999974E-6 : f32
    %19 = vector.broadcast %cst_12 : f32 to vector<16x1xf32>
    %20 = arith.addf %16, %19 : vector<16x1xf32>
    %21 = math.rsqrt %20 : vector<16x1xf32>
    %22 = vector.broadcast %21 : vector<16x1xf32> to vector<16x32xf32>
    %23 = arith.mulf %18, %22 : vector<16x32xf32>
    %24 = vector.broadcast %4 : vector<1x32xf32> to vector<16x32xf32>
    %25 = arith.mulf %23, %24 : vector<16x32xf32>
    %26 = vector.broadcast %5 : vector<1x32xf32> to vector<16x32xf32>
    %27 = arith.addf %25, %26 : vector<16x32xf32>
    %c0_13 = arith.constant 0 : index
    %c0_14 = arith.constant 0 : index
    %28 = vector.load %arg9[%c0_13, %c0_14] : memref<32x64xf32, #tpu.memory_space<vmem>>, vector<32x64xf32>
    %cst_15 = arith.constant dense<0.000000e+00> : vector<16x64xf32>
    %29 = tpu.matmul %27, %28, %cst_15 {dimension_numbers = #tpu.dot_dimension_numbers<[1], [0], [0], [1], [0, 0, 1, 1], [], []>} : vector<16x32xf32>, vector<32x64xf32>, vector<16x64xf32> -> vector<16x64xf32>
    %c0_16 = arith.constant 0 : index
    %c0_17 = arith.constant 0 : index
    %30 = vector.load %arg3[%c0_16, %c0_17] : memref<1x32xf32, #tpu.memory_space<vmem>>, vector<1x32xf32>
    %c0_18 = arith.constant 0 : index
    %c0_19 = arith.constant 0 : index
    %31 = vector.load %arg4[%c0_18, %c0_19] : memref<1x32xf32, #tpu.memory_space<vmem>>, vector<1x32xf32>
    %cst_20 = arith.constant dense<0.000000e+00> : vector<8xf32>
    %32 = vector.multi_reduction <add>, %1, %cst_20 [1] : vector<8x32xf32> to vector<8xf32>
    %33 = vector.shape_cast %32 : vector<8xf32> to vector<8x1xf32>
    %cst_21 = arith.constant 3.200000e+01 : f32
    %34 = vector.broadcast %cst_21 : f32 to vector<8x1xf32>
    %35 = arith.divf %33, %34 : vector<8x1xf32>
    %36 = vector.broadcast %35 : vector<8x1xf32> to vector<8x32xf32>
    %37 = arith.subf %1, %36 : vector<8x32xf32>
    %38 = arith.mulf %37, %37 : vector<8x32xf32>
    %cst_22 = arith.constant dense<0.000000e+00> : vector<8xf32>
    %39 = vector.multi_reduction <add>, %38, %cst_22 [1] : vector<8x32xf32> to vector<8xf32>
    %40 = vector.shape_cast %39 : vector<8xf32> to vector<8x1xf32>
    %cst_23 = arith.constant 3.200000e+01 : f32
    %41 = vector.broadcast %cst_23 : f32 to vector<8x1xf32>
    %42 = arith.divf %40, %41 : vector<8x1xf32>
    %43 = vector.broadcast %35 : vector<8x1xf32> to vector<8x32xf32>
    %44 = arith.subf %1, %43 : vector<8x32xf32>
    %cst_24 = arith.constant 9.99999974E-6 : f32
    %45 = vector.broadcast %cst_24 : f32 to vector<8x1xf32>
    %46 = arith.addf %42, %45 : vector<8x1xf32>
    %47 = math.rsqrt %46 : vector<8x1xf32>
    %48 = vector.broadcast %47 : vector<8x1xf32> to vector<8x32xf32>
    %49 = arith.mulf %44, %48 : vector<8x32xf32>
    %50 = vector.broadcast %30 : vector<1x32xf32> to vector<8x32xf32>
    %51 = arith.mulf %49, %50 : vector<8x32xf32>
    %52 = vector.broadcast %31 : vector<1x32xf32> to vector<8x32xf32>
    %53 = arith.addf %51, %52 : vector<8x32xf32>
    %c0_25 = arith.constant 0 : index
    %c0_26 = arith.constant 0 : index
    %54 = vector.load %arg5[%c0_25, %c0_26] : memref<32x32xf32, #tpu.memory_space<vmem>>, vector<32x32xf32>
    %cst_27 = arith.constant dense<0.000000e+00> : vector<8x32xf32>
    %55 = tpu.matmul %53, %54, %cst_27 {dimension_numbers = #tpu.dot_dimension_numbers<[1], [0], [0], [1], [0, 0, 1, 1], [], []>} : vector<8x32xf32>, vector<32x32xf32>, vector<8x32xf32> -> vector<8x32xf32>
    %cst_28 = arith.constant 0.353553385 : f32
    %56 = vector.broadcast %cst_28 : f32 to vector<8x32xf32>
    %57 = arith.mulf %55, %56 : vector<8x32xf32>
    %58 = vector.extract_strided_slice %57 {offsets = [0, 0], sizes = [8, 8], strides = [1, 1]} : vector<8x32xf32> to vector<8x8xf32>
    %59 = vector.extract_strided_slice %29 {offsets = [0, 0], sizes = [16, 8], strides = [1, 1]} : vector<16x64xf32> to vector<16x8xf32>
    %60 = vector.extract_strided_slice %29 {offsets = [0, 32], sizes = [16, 8], strides = [1, 1]} : vector<16x64xf32> to vector<16x8xf32>
    %cst_29 = arith.constant dense<0.000000e+00> : vector<8x16xf32>
    %61 = tpu.matmul %58, %59, %cst_29 {dimension_numbers = #tpu.dot_dimension_numbers<[1], [1], [0], [0], [0, 0, 1, 0], [], []>} : vector<8x8xf32>, vector<16x8xf32>, vector<8x16xf32> -> vector<8x16xf32>
    %cst_30 = arith.constant dense<0xFF800000> : vector<8xf32>
    %62 = vector.multi_reduction <maximumf>, %61, %cst_30 [1] : vector<8x16xf32> to vector<8xf32>
    %63 = vector.shape_cast %62 : vector<8xf32> to vector<8x1xf32>
    %64 = vector.broadcast %63 : vector<8x1xf32> to vector<8x16xf32>
    %65 = arith.subf %61, %64 : vector<8x16xf32>
    %66 = math.exp %65 : vector<8x16xf32>
    %cst_31 = arith.constant dense<0.000000e+00> : vector<8xf32>
    %67 = vector.multi_reduction <add>, %66, %cst_31 [1] : vector<8x16xf32> to vector<8xf32>
    %68 = vector.shape_cast %67 : vector<8xf32> to vector<8x1xf32>
    %cst_32 = arith.constant 1.000000e+00 : f32
    %69 = vector.broadcast %cst_32 : f32 to vector<8x1xf32>
    %70 = arith.divf %69, %68 : vector<8x1xf32>
    %cst_33 = arith.constant dense<0.000000e+00> : vector<8x8xf32>
    %71 = tpu.matmul %66, %60, %cst_33 {dimension_numbers = #tpu.dot_dimension_numbers<[1], [0], [0], [1], [0, 0, 1, 1], [], []>} : vector<8x16xf32>, vector<16x8xf32>, vector<8x8xf32> -> vector<8x8xf32>
    %72 = vector.broadcast %70 : vector<8x1xf32> to vector<8x8xf32>
    %73 = arith.mulf %71, %72 : vector<8x8xf32>
    %c0_34 = arith.constant 0 : index
    %c0_35 = arith.constant 0 : index
    %74 = vector.load %arg13[%c0_34, %c0_35] : memref<8x32xf32, #tpu.memory_space<vmem>>, vector<8x8xf32>
    tpu.vector_store %arg13[%c0_34, %c0_35], %73 {strides = array<i32>} : memref<8x32xf32, #tpu.memory_space<vmem>>, vector<8x8xf32>,
    %75 = vector.extract_strided_slice %57 {offsets = [0, 8], sizes = [8, 8], strides = [1, 1]} : vector<8x32xf32> to vector<8x8xf32>
    %76 = vector.extract_strided_slice %29 {offsets = [0, 8], sizes = [16, 8], strides = [1, 1]} : vector<16x64xf32> to vector<16x8xf32>
    %77 = vector.extract_strided_slice %29 {offsets = [0, 40], sizes = [16, 8], strides = [1, 1]} : vector<16x64xf32> to vector<16x8xf32>
    %cst_36 = arith.constant dense<0.000000e+00> : vector<8x16xf32>
    %78 = tpu.matmul %75, %76, %cst_36 {dimension_numbers = #tpu.dot_dimension_numbers<[1], [1], [0], [0], [0, 0, 1, 0], [], []>} : vector<8x8xf32>, vector<16x8xf32>, vector<8x16xf32> -> vector<8x16xf32>
    %cst_37 = arith.constant dense<0xFF800000> : vector<8xf32>
    %79 = vector.multi_reduction <maximumf>, %78, %cst_37 [1] : vector<8x16xf32> to vector<8xf32>
    %80 = vector.shape_cast %79 : vector<8xf32> to vector<8x1xf32>
    %81 = vector.broadcast %80 : vector<8x1xf32> to vector<8x16xf32>
    %82 = arith.subf %78, %81 : vector<8x16xf32>
    %83 = math.exp %82 : vector<8x16xf32>
    %cst_38 = arith.constant dense<0.000000e+00> : vector<8xf32>
    %84 = vector.multi_reduction <add>, %83, %cst_38 [1] : vector<8x16xf32> to vector<8xf32>
    %85 = vector.shape_cast %84 : vector<8xf32> to vector<8x1xf32>
    %cst_39 = arith.constant 1.000000e+00 : f32
    %86 = vector.broadcast %cst_39 : f32 to vector<8x1xf32>
    %87 = arith.divf %86, %85 : vector<8x1xf32>
    %cst_40 = arith.constant dense<0.000000e+00> : vector<8x8xf32>
    %88 = tpu.matmul %83, %77, %cst_40 {dimension_numbers = #tpu.dot_dimension_numbers<[1], [0], [0], [1], [0, 0, 1, 1], [], []>} : vector<8x16xf32>, vector<16x8xf32>, vector<8x8xf32> -> vector<8x8xf32>
    %89 = vector.broadcast %87 : vector<8x1xf32> to vector<8x8xf32>
    %90 = arith.mulf %88, %89 : vector<8x8xf32>
    %c0_41 = arith.constant 0 : index
    %c8 = arith.constant 8 : index
    %91 = vector.load %arg13[%c0_41, %c8] : memref<8x32xf32, #tpu.memory_space<vmem>>, vector<8x8xf32>
    tpu.vector_store %arg13[%c0_41, %c8], %90 {strides = array<i32>} : memref<8x32xf32, #tpu.memory_space<vmem>>, vector<8x8xf32>,
    %92 = vector.extract_strided_slice %57 {offsets = [0, 16], sizes = [8, 8], strides = [1, 1]} : vector<8x32xf32> to vector<8x8xf32>
    %93 = vector.extract_strided_slice %29 {offsets = [0, 16], sizes = [16, 8], strides = [1, 1]} : vector<16x64xf32> to vector<16x8xf32>
    %94 = vector.extract_strided_slice %29 {offsets = [0, 48], sizes = [16, 8], strides = [1, 1]} : vector<16x64xf32> to vector<16x8xf32>
    %cst_42 = arith.constant dense<0.000000e+00> : vector<8x16xf32>
    %95 = tpu.matmul %92, %93, %cst_42 {dimension_numbers = #tpu.dot_dimension_numbers<[1], [1], [0], [0], [0, 0, 1, 0], [], []>} : vector<8x8xf32>, vector<16x8xf32>, vector<8x16xf32> -> vector<8x16xf32>
    %cst_43 = arith.constant dense<0xFF800000> : vector<8xf32>
    %96 = vector.multi_reduction <maximumf>, %95, %cst_43 [1] : vector<8x16xf32> to vector<8xf32>
    %97 = vector.shape_cast %96 : vector<8xf32> to vector<8x1xf32>
    %98 = vector.broadcast %97 : vector<8x1xf32> to vector<8x16xf32>
    %99 = arith.subf %95, %98 : vector<8x16xf32>
    %100 = math.exp %99 : vector<8x16xf32>
    %cst_44 = arith.constant dense<0.000000e+00> : vector<8xf32>
    %101 = vector.multi_reduction <add>, %100, %cst_44 [1] : vector<8x16xf32> to vector<8xf32>
    %102 = vector.shape_cast %101 : vector<8xf32> to vector<8x1xf32>
    %cst_45 = arith.constant 1.000000e+00 : f32
    %103 = vector.broadcast %cst_45 : f32 to vector<8x1xf32>
    %104 = arith.divf %103, %102 : vector<8x1xf32>
    %cst_46 = arith.constant dense<0.000000e+00> : vector<8x8xf32>
    %105 = tpu.matmul %100, %94, %cst_46 {dimension_numbers = #tpu.dot_dimension_numbers<[1], [0], [0], [1], [0, 0, 1, 1], [], []>} : vector<8x16xf32>, vector<16x8xf32>, vector<8x8xf32> -> vector<8x8xf32>
    %106 = vector.broadcast %104 : vector<8x1xf32> to vector<8x8xf32>
    %107 = arith.mulf %105, %106 : vector<8x8xf32>
    %c0_47 = arith.constant 0 : index
    %c16 = arith.constant 16 : index
    %108 = vector.load %arg13[%c0_47, %c16] : memref<8x32xf32, #tpu.memory_space<vmem>>, vector<8x8xf32>
    tpu.vector_store %arg13[%c0_47, %c16], %107 {strides = array<i32>} : memref<8x32xf32, #tpu.memory_space<vmem>>, vector<8x8xf32>,
    %109 = vector.extract_strided_slice %57 {offsets = [0, 24], sizes = [8, 8], strides = [1, 1]} : vector<8x32xf32> to vector<8x8xf32>
    %110 = vector.extract_strided_slice %29 {offsets = [0, 24], sizes = [16, 8], strides = [1, 1]} : vector<16x64xf32> to vector<16x8xf32>
    %111 = vector.extract_strided_slice %29 {offsets = [0, 56], sizes = [16, 8], strides = [1, 1]} : vector<16x64xf32> to vector<16x8xf32>
    %cst_48 = arith.constant dense<0.000000e+00> : vector<8x16xf32>
    %112 = tpu.matmul %109, %110, %cst_48 {dimension_numbers = #tpu.dot_dimension_numbers<[1], [1], [0], [0], [0, 0, 1, 0], [], []>} : vector<8x8xf32>, vector<16x8xf32>, vector<8x16xf32> -> vector<8x16xf32>
    %cst_49 = arith.constant dense<0xFF800000> : vector<8xf32>
    %113 = vector.multi_reduction <maximumf>, %112, %cst_49 [1] : vector<8x16xf32> to vector<8xf32>
    %114 = vector.shape_cast %113 : vector<8xf32> to vector<8x1xf32>
    %115 = vector.broadcast %114 : vector<8x1xf32> to vector<8x16xf32>
    %116 = arith.subf %112, %115 : vector<8x16xf32>
    %117 = math.exp %116 : vector<8x16xf32>
    %cst_50 = arith.constant dense<0.000000e+00> : vector<8xf32>
    %118 = vector.multi_reduction <add>, %117, %cst_50 [1] : vector<8x16xf32> to vector<8xf32>
    %119 = vector.shape_cast %118 : vector<8xf32> to vector<8x1xf32>
    %cst_51 = arith.constant 1.000000e+00 : f32
    %120 = vector.broadcast %cst_51 : f32 to vector<8x1xf32>
    %121 = arith.divf %120, %119 : vector<8x1xf32>
    %cst_52 = arith.constant dense<0.000000e+00> : vector<8x8xf32>
    %122 = tpu.matmul %117, %111, %cst_52 {dimension_numbers = #tpu.dot_dimension_numbers<[1], [0], [0], [1], [0, 0, 1, 1], [], []>} : vector<8x16xf32>, vector<16x8xf32>, vector<8x8xf32> -> vector<8x8xf32>
    %123 = vector.broadcast %121 : vector<8x1xf32> to vector<8x8xf32>
    %124 = arith.mulf %122, %123 : vector<8x8xf32>
    %c0_53 = arith.constant 0 : index
    %c24 = arith.constant 24 : index
    %125 = vector.load %arg13[%c0_53, %c24] : memref<8x32xf32, #tpu.memory_space<vmem>>, vector<8x8xf32>
    tpu.vector_store %arg13[%c0_53, %c24], %124 {strides = array<i32>} : memref<8x32xf32, #tpu.memory_space<vmem>>, vector<8x8xf32>,
    %c0_54 = arith.constant 0 : index
    %c0_55 = arith.constant 0 : index
    %126 = vector.load %arg13[%c0_54, %c0_55] : memref<8x32xf32, #tpu.memory_space<vmem>>, vector<8x32xf32>
    %c0_56 = arith.constant 0 : index
    %c0_57 = arith.constant 0 : index
    %127 = vector.load %arg10[%c0_56, %c0_57] : memref<32x32xf32, #tpu.memory_space<vmem>>, vector<32x32xf32>
    %cst_58 = arith.constant dense<0.000000e+00> : vector<8x32xf32>
    %128 = tpu.matmul %126, %127, %cst_58 {dimension_numbers = #tpu.dot_dimension_numbers<[1], [0], [0], [1], [0, 0, 1, 1], [], []>} : vector<8x32xf32>, vector<32x32xf32>, vector<8x32xf32> -> vector<8x32xf32>
    %c0_59 = arith.constant 0 : index
    %c0_60 = arith.constant 0 : index
    %129 = vector.load %arg11[%c0_59, %c0_60] : memref<1x32xf32, #tpu.memory_space<vmem>>, vector<1x32xf32>
    %130 = vector.broadcast %129 : vector<1x32xf32> to vector<8x32xf32>
    %131 = arith.addf %128, %130 : vector<8x32xf32>
    %132 = arith.addf %1, %131 : vector<8x32xf32>
    %c0_61 = arith.constant 0 : index
    %c0_62 = arith.constant 0 : index
    %c0_63 = arith.constant 0 : index
    %133 = vector.load %arg12[%c0_61, %c0_62, %c0_63] : memref<1x8x32xf32, #tpu.memory_space<vmem>>, vector<1x8x32xf32>
    %134 = vector.shape_cast %133 : vector<1x8x32xf32> to vector<8x32xf32>
    %135 = vector.shape_cast %132 : vector<8x32xf32> to vector<1x8x32xf32>
    tpu.vector_store %arg12[%c0_61, %c0_62, %c0_63], %135 {strides = array<i32>} : memref<1x8x32xf32, #tpu.memory_space<vmem>>, vector<1x8x32xf32>,
    return
  }
  func.func @transform_0(%arg0: i32, %arg1: i32) -> (i32, i32, i32) {
    %c0_i32 = arith.constant 0 : i32
    %c0_i32_0 = arith.constant 0 : i32
    return %arg0, %arg1, %c0_i32 : i32, i32, i32
  }
  func.func @transform_1(%arg0: i32, %arg1: i32) -> (i32, i32) {
    %c0_i32 = arith.constant 0 : i32
    %c0_i32_0 = arith.constant 0 : i32
    %c0_i32_1 = arith.constant 0 : i32
    return %c0_i32, %c0_i32_0 : i32, i32
  }
  func.func @transform_2(%arg0: i32, %arg1: i32) -> (i32, i32) {
    %c0_i32 = arith.constant 0 : i32
    %c0_i32_0 = arith.constant 0 : i32
    %c0_i32_1 = arith.constant 0 : i32
    return %c0_i32, %c0_i32_0 : i32, i32
  }
  func.func @transform_3(%arg0: i32, %arg1: i32) -> (i32, i32) {
    %c0_i32 = arith.constant 0 : i32
    %c0_i32_0 = arith.constant 0 : i32
    %c0_i32_1 = arith.constant 0 : i32
    return %c0_i32, %c0_i32_0 : i32, i32
  }
  func.func @transform_4(%arg0: i32, %arg1: i32) -> (i32, i32, i32) {
    %c0_i32 = arith.constant 0 : i32
    %c0_i32_0 = arith.constant 0 : i32
    %c0_i32_1 = arith.constant 0 : i32
    return %arg0, %c0_i32, %c0_i32_0 : i32, i32, i32
  }
  func.func @transform_5(%arg0: i32, %arg1: i32) -> (i32, i32) {
    %c0_i32 = arith.constant 0 : i32
    %c0_i32_0 = arith.constant 0 : i32
    %c0_i32_1 = arith.constant 0 : i32
    return %c0_i32, %c0_i32_0 : i32, i32
  }
  func.func @transform_6(%arg0: i32, %arg1: i32) -> (i32, i32) {
    %c0_i32 = arith.constant 0 : i32
    %c0_i32_0 = arith.constant 0 : i32
    %c0_i32_1 = arith.constant 0 : i32
    return %c0_i32, %c0_i32_0 : i32, i32
  }
  func.func @transform_7(%arg0: i32, %arg1: i32) -> (i32, i32) {
    %c0_i32 = arith.constant 0 : i32
    %c0_i32_0 = arith.constant 0 : i32
    %c0_i32_1 = arith.constant 0 : i32
    return %c0_i32, %c0_i32_0 : i32, i32
  }
  func.func @transform_8(%arg0: i32, %arg1: i32) -> (i32, i32) {
    %c0_i32 = arith.constant 0 : i32
    %c0_i32_0 = arith.constant 0 : i32
    %c0_i32_1 = arith.constant 0 : i32
    return %c0_i32, %c0_i32_0 : i32, i32
  }
  func.func @transform_9(%arg0: i32, %arg1: i32) -> (i32, i32) {
    %c0_i32 = arith.constant 0 : i32
    %c0_i32_0 = arith.constant 0 : i32
    %c0_i32_1 = arith.constant 0 : i32
    return %c0_i32, %c0_i32_0 : i32, i32
  }
  func.func @transform_10(%arg0: i32, %arg1: i32) -> (i32, i32, i32) {
    %c0_i32 = arith.constant 0 : i32
    %c0_i32_0 = arith.constant 0 : i32
    return %arg0, %arg1, %c0_i32 : i32, i32, i32
  }
}

module attributes {stable_mosaic.version = 11 : i64} {
  func.func @_mlp_block_kernel(%arg0: i32, %arg1: memref<16x32xf32, #tpu.memory_space<vmem>>, %arg2: memref<1x32xf32, #tpu.memory_space<vmem>>, %arg3: memref<1x32xf32, #tpu.memory_space<vmem>>, %arg4: memref<32x128xf32, #tpu.memory_space<vmem>>, %arg5: memref<1x128xf32, #tpu.memory_space<vmem>>, %arg6: memref<128x32xf32, #tpu.memory_space<vmem>>, %arg7: memref<1x32xf32, #tpu.memory_space<vmem>>, %arg8: memref<16x32xf32, #tpu.memory_space<vmem>>) attributes {dimension_semantics = [#tpu.dimension_semantics<parallel>], iteration_bounds = array<i64: 1>, scalar_prefetch = 0 : i64, scratch_operands = 0 : i64, tpu.core_type = #tpu.core_type<tc>, window_params = [{transform_indices = @transform_0, window_bounds = array<i64: 16, 32>}, {pipeline_mode = #tpu.pipeline_mode<synchronous>, transform_indices = @transform_1, window_bounds = array<i64: 1, 32>}, {pipeline_mode = #tpu.pipeline_mode<synchronous>, transform_indices = @transform_2, window_bounds = array<i64: 1, 32>}, {pipeline_mode = #tpu.pipeline_mode<synchronous>, transform_indices = @transform_3, window_bounds = array<i64: 32, 128>}, {pipeline_mode = #tpu.pipeline_mode<synchronous>, transform_indices = @transform_4, window_bounds = array<i64: 1, 128>}, {pipeline_mode = #tpu.pipeline_mode<synchronous>, transform_indices = @transform_5, window_bounds = array<i64: 128, 32>}, {pipeline_mode = #tpu.pipeline_mode<synchronous>, transform_indices = @transform_6, window_bounds = array<i64: 1, 32>}, {transform_indices = @transform_7, window_bounds = array<i64: 16, 32>}]} {
    %c0 = arith.constant 0 : index
    %c0_0 = arith.constant 0 : index
    %0 = vector.load %arg1[%c0, %c0_0] : memref<16x32xf32, #tpu.memory_space<vmem>>, vector<16x32xf32>
    %c0_1 = arith.constant 0 : index
    %c0_2 = arith.constant 0 : index
    %1 = vector.load %arg1[%c0_1, %c0_2] : memref<16x32xf32, #tpu.memory_space<vmem>>, vector<16x32xf32>
    %c0_3 = arith.constant 0 : index
    %c0_4 = arith.constant 0 : index
    %2 = vector.load %arg2[%c0_3, %c0_4] : memref<1x32xf32, #tpu.memory_space<vmem>>, vector<1x32xf32>
    %c0_5 = arith.constant 0 : index
    %c0_6 = arith.constant 0 : index
    %3 = vector.load %arg3[%c0_5, %c0_6] : memref<1x32xf32, #tpu.memory_space<vmem>>, vector<1x32xf32>
    %cst = arith.constant dense<0.000000e+00> : vector<16xf32>
    %4 = vector.multi_reduction <add>, %1, %cst [1] : vector<16x32xf32> to vector<16xf32>
    %5 = vector.shape_cast %4 : vector<16xf32> to vector<16x1xf32>
    %cst_7 = arith.constant 3.200000e+01 : f32
    %6 = vector.broadcast %cst_7 : f32 to vector<16x1xf32>
    %7 = arith.divf %5, %6 : vector<16x1xf32>
    %8 = vector.broadcast %7 : vector<16x1xf32> to vector<16x32xf32>
    %9 = arith.subf %1, %8 : vector<16x32xf32>
    %10 = arith.mulf %9, %9 : vector<16x32xf32>
    %cst_8 = arith.constant dense<0.000000e+00> : vector<16xf32>
    %11 = vector.multi_reduction <add>, %10, %cst_8 [1] : vector<16x32xf32> to vector<16xf32>
    %12 = vector.shape_cast %11 : vector<16xf32> to vector<16x1xf32>
    %cst_9 = arith.constant 3.200000e+01 : f32
    %13 = vector.broadcast %cst_9 : f32 to vector<16x1xf32>
    %14 = arith.divf %12, %13 : vector<16x1xf32>
    %15 = vector.broadcast %7 : vector<16x1xf32> to vector<16x32xf32>
    %16 = arith.subf %1, %15 : vector<16x32xf32>
    %cst_10 = arith.constant 9.99999974E-6 : f32
    %17 = vector.broadcast %cst_10 : f32 to vector<16x1xf32>
    %18 = arith.addf %14, %17 : vector<16x1xf32>
    %19 = math.rsqrt %18 : vector<16x1xf32>
    %20 = vector.broadcast %19 : vector<16x1xf32> to vector<16x32xf32>
    %21 = arith.mulf %16, %20 : vector<16x32xf32>
    %22 = vector.broadcast %2 : vector<1x32xf32> to vector<16x32xf32>
    %23 = arith.mulf %21, %22 : vector<16x32xf32>
    %24 = vector.broadcast %3 : vector<1x32xf32> to vector<16x32xf32>
    %25 = arith.addf %23, %24 : vector<16x32xf32>
    %c0_11 = arith.constant 0 : index
    %c0_12 = arith.constant 0 : index
    %26 = vector.load %arg4[%c0_11, %c0_12] : memref<32x128xf32, #tpu.memory_space<vmem>>, vector<32x128xf32>
    %cst_13 = arith.constant dense<0.000000e+00> : vector<16x128xf32>
    %27 = tpu.matmul %25, %26, %cst_13 {dimension_numbers = #tpu.dot_dimension_numbers<[1], [0], [0], [1], [0, 0, 1, 1], [], []>} : vector<16x32xf32>, vector<32x128xf32>, vector<16x128xf32> -> vector<16x128xf32>
    %c0_14 = arith.constant 0 : index
    %c0_15 = arith.constant 0 : index
    %28 = vector.load %arg5[%c0_14, %c0_15] : memref<1x128xf32, #tpu.memory_space<vmem>>, vector<1x128xf32>
    %29 = vector.broadcast %28 : vector<1x128xf32> to vector<16x128xf32>
    %30 = arith.addf %27, %29 : vector<16x128xf32>
    %cst_16 = arith.constant 5.000000e-01 : f32
    %31 = vector.broadcast %cst_16 : f32 to vector<16x128xf32>
    %32 = arith.mulf %31, %30 : vector<16x128xf32>
    %cst_17 = arith.constant 0.707106769 : f32
    %33 = vector.broadcast %cst_17 : f32 to vector<16x128xf32>
    %34 = arith.mulf %30, %33 : vector<16x128xf32>
    %35 = math.erf %34 : vector<16x128xf32>
    %cst_18 = arith.constant 1.000000e+00 : f32
    %36 = vector.broadcast %cst_18 : f32 to vector<16x128xf32>
    %37 = arith.addf %36, %35 : vector<16x128xf32>
    %38 = arith.mulf %32, %37 : vector<16x128xf32>
    %c0_19 = arith.constant 0 : index
    %c0_20 = arith.constant 0 : index
    %39 = vector.load %arg6[%c0_19, %c0_20] : memref<128x32xf32, #tpu.memory_space<vmem>>, vector<128x32xf32>
    %cst_21 = arith.constant dense<0.000000e+00> : vector<16x32xf32>
    %40 = tpu.matmul %38, %39, %cst_21 {dimension_numbers = #tpu.dot_dimension_numbers<[1], [0], [0], [1], [0, 0, 1, 1], [], []>} : vector<16x128xf32>, vector<128x32xf32>, vector<16x32xf32> -> vector<16x32xf32>
    %c0_22 = arith.constant 0 : index
    %c0_23 = arith.constant 0 : index
    %41 = vector.load %arg7[%c0_22, %c0_23] : memref<1x32xf32, #tpu.memory_space<vmem>>, vector<1x32xf32>
    %42 = vector.broadcast %41 : vector<1x32xf32> to vector<16x32xf32>
    %43 = arith.addf %40, %42 : vector<16x32xf32>
    %44 = arith.addf %0, %43 : vector<16x32xf32>
    %c0_24 = arith.constant 0 : index
    %c0_25 = arith.constant 0 : index
    %45 = vector.load %arg8[%c0_24, %c0_25] : memref<16x32xf32, #tpu.memory_space<vmem>>, vector<16x32xf32>
    tpu.vector_store %arg8[%c0_24, %c0_25], %44 {strides = array<i32>} : memref<16x32xf32, #tpu.memory_space<vmem>>, vector<16x32xf32>,
    return
  }
  func.func @transform_0(%arg0: i32) -> (i32, i32) {
    %c0_i32 = arith.constant 0 : i32
    %c0_i32_0 = arith.constant 0 : i32
    return %arg0, %c0_i32 : i32, i32
  }
  func.func @transform_1(%arg0: i32) -> (i32, i32) {
    %c0_i32 = arith.constant 0 : i32
    %c0_i32_0 = arith.constant 0 : i32
    %c0_i32_1 = arith.constant 0 : i32
    return %c0_i32, %c0_i32_0 : i32, i32
  }
  func.func @transform_2(%arg0: i32) -> (i32, i32) {
    %c0_i32 = arith.constant 0 : i32
    %c0_i32_0 = arith.constant 0 : i32
    %c0_i32_1 = arith.constant 0 : i32
    return %c0_i32, %c0_i32_0 : i32, i32
  }
  func.func @transform_3(%arg0: i32) -> (i32, i32) {
    %c0_i32 = arith.constant 0 : i32
    %c0_i32_0 = arith.constant 0 : i32
    %c0_i32_1 = arith.constant 0 : i32
    return %c0_i32, %c0_i32_0 : i32, i32
  }
  func.func @transform_4(%arg0: i32) -> (i32, i32) {
    %c0_i32 = arith.constant 0 : i32
    %c0_i32_0 = arith.constant 0 : i32
    %c0_i32_1 = arith.constant 0 : i32
    return %c0_i32, %c0_i32_0 : i32, i32
  }
  func.func @transform_5(%arg0: i32) -> (i32, i32) {
    %c0_i32 = arith.constant 0 : i32
    %c0_i32_0 = arith.constant 0 : i32
    %c0_i32_1 = arith.constant 0 : i32
    return %c0_i32, %c0_i32_0 : i32, i32
  }
  func.func @transform_6(%arg0: i32) -> (i32, i32) {
    %c0_i32 = arith.constant 0 : i32
    %c0_i32_0 = arith.constant 0 : i32
    %c0_i32_1 = arith.constant 0 : i32
    return %c0_i32, %c0_i32_0 : i32, i32
  }
  func.func @transform_7(%arg0: i32) -> (i32, i32) {
    %c0_i32 = arith.constant 0 : i32
    %c0_i32_0 = arith.constant 0 : i32
    return %arg0, %c0_i32 : i32, i32
  }
}

</mosaic_0001>

<llo_original>
// kernel: decoder_fuser_pallas.5
$region0: #{decoder_fuser_pallas.5}
  #allocation0 [shape = 'u32[]', space=smem, size = 0x4, offset = 0x4, fixed_abs, tag = 'smem constant byte address 0x4 - core index']
  #allocation1 [shape = 'u32[144,128]{1,0:T(1,128)}', space=vmem, size = 0x12000, scoped, tag = 'internal scratch']
  %s0 = inlined_call_operand.hbm [shape: f32[16,32], index: 0, kind: input, shape index: {}]
  %s1 = inlined_call_operand.hbm [shape: f32[1,32], index: 1, kind: input, shape index: {}]
  %s2 = inlined_call_operand.hbm [shape: f32[1,32], index: 2, kind: input, shape index: {}]
  %s3 = inlined_call_operand.hbm [shape: f32[32,128], index: 3, kind: input, shape index: {}]
  %s4 = inlined_call_operand.hbm [shape: f32[1,128], index: 4, kind: input, shape index: {}]
  %s5 = inlined_call_operand.hbm [shape: f32[128,32], index: 5, kind: input, shape index: {}]
  %s6 = inlined_call_operand.hbm [shape: f32[1,32], index: 6, kind: input, shape index: {}]
  %s7 = inlined_call_operand.hbm [shape: f32[16,32], index: 7, kind: output, shape index: {}]
  %s8 = sld [smem:[#allocation0]]
  $region66: #{decoder_fuser_pallas.5} parent=0
    _
  %s10 = ssub.s32 1, %s8
  %s11 = scalar_select 0, %s10, %s8
  $region1: #{decoder_fuser_pallas.5} parent=0
    #allocation2 [shape = 'u8[8192]{0}', space=vmem, size = 0x2000, scoped, tag = 'input window, operand 0, single buffered']
    #allocation3 [shape = 's32[1]{0}', space=sflag, size = 0x4, scoped, tag = 'scoped memory for decoder_fuser_pallas.5']
    #allocation4 [shape = 's32[1]{0}', space=sflag, size = 0x4, scoped, tag = 'scoped memory for decoder_fuser_pallas.5']
    #allocation5 [shape = 'u8[512]{0}', space=vmem, size = 0x400, scoped, tag = 'input window, operand 1, single buffered']
    #allocation6 [shape = 's32[1]{0}', space=sflag, size = 0x4, scoped, tag = 'scoped memory for decoder_fuser_pallas.5']
    #allocation7 [shape = 'u8[512]{0}', space=vmem, size = 0x400, scoped, tag = 'input window, operand 2, single buffered']
    #allocation8 [shape = 'u8[16384]{0}', space=vmem, size = 0x4000, scoped, tag = 'input window, operand 3, single buffered']
    #allocation9 [shape = 's32[1]{0}', space=sflag, size = 0x4, scoped, tag = 'scoped memory for decoder_fuser_pallas.5']
    #allocation10 [shape = 'u8[512]{0}', space=vmem, size = 0x400, scoped, tag = 'input window, operand 4, single buffered']
    #allocation11 [shape = 'u8[65536]{0}', space=vmem, size = 0x10000, scoped, tag = 'input window, operand 5, single buffered']
    #allocation12 [shape = 's32[1]{0}', space=sflag, size = 0x4, scoped, tag = 'scoped memory for decoder_fuser_pallas.5']
    #allocation13 [shape = 'u8[512]{0}', space=vmem, size = 0x400, scoped, tag = 'input window, operand 6, single buffered']
    #allocation14 [shape = 'u8[8192]{0}', space=vmem, size = 0x2000, scoped, tag = 'output window, operand 0, single buffered']
    %12 = vsyncpa [#allocation3], 0
    %13 = vsyncpa [#allocation6], 0
    %14 = vsyncpa [#allocation9], 0
    %15 = vsyncpa [#allocation12], 0
    %16 = vsyncpa [#allocation4], 0
    // Predicated region
    $region2: #{decoder_fuser_pallas.5} parent=1 // pred_check
      _
    $region3: #{decoder_fuser_pallas.5} parent=1 // pred_check_branch
      %18 = sbr.rel (0) target = $region5
    $region4: #{decoder_fuser_pallas.5} parent=1 // pred_region
      %s20 = ssub.s32 256, 256
      %21 = vsyncadd [#allocation3], %s20
      %s22 = sshll.u32 [#allocation2], 4
      %s23 = int_to_ptr.vmem [resolvable:$true] %s22
      %28 = dma.hbm_to_vmem [thread:$0]  %s0, 256, %s23, [#allocation3], 128, 128, 8
    $region5: #{decoder_fuser_pallas.5} parent=1 // pred_fallthru
      _
    // Predicated region
    $region6: #{decoder_fuser_pallas.5} parent=1 // pred_check
      _
    $region7: #{decoder_fuser_pallas.5} parent=1 // pred_check_branch
      %30 = sbr.rel (0) target = $region9
    $region8: #{decoder_fuser_pallas.5} parent=1 // pred_region
      %s32 = ssub.s32 16, 16
      %33 = vsyncadd [#allocation6], %s32
      %s35 = sshll.u32 [#allocation5], 4
      %s36 = int_to_ptr.vmem [resolvable:$true] %s35
      %38 = dma.hbm_to_vmem [thread:$0]  %s1, 16, %s36, [#allocation6]
    $region9: #{decoder_fuser_pallas.5} parent=1 // pred_fallthru
      _
    // Predicated region
    $region10: #{decoder_fuser_pallas.5} parent=1 // pred_check
      _
    $region11: #{decoder_fuser_pallas.5} parent=1 // pred_check_branch
      %40 = sbr.rel (0) target = $region13
    $region12: #{decoder_fuser_pallas.5} parent=1 // pred_region
      %s42 = ssub.s32 16, 16
      %43 = vsyncadd [#allocation6], %s42
      %s45 = sshll.u32 [#allocation7], 4
      %s46 = int_to_ptr.vmem [resolvable:$true] %s45
      %48 = dma.hbm_to_vmem [thread:$0]  %s2, 16, %s46, [#allocation6]
    $region13: #{decoder_fuser_pallas.5} parent=1 // pred_fallthru
      _
    // Predicated region
    $region14: #{decoder_fuser_pallas.5} parent=1 // pred_check
      _
    $region15: #{decoder_fuser_pallas.5} parent=1 // pred_check_branch
      %50 = sbr.rel (0) target = $region17
    $region16: #{decoder_fuser_pallas.5} parent=1 // pred_region
      %s52 = ssub.s32 512, 512
      %53 = vsyncadd [#allocation9], %s52
      %s54 = sshll.u32 [#allocation8], 4
      %s55 = int_to_ptr.vmem [resolvable:$true] %s54
      %60 = dma.hbm_to_vmem [thread:$0]  %s3, 512, %s55, [#allocation9], 128, 128, 8
    $region17: #{decoder_fuser_pallas.5} parent=1 // pred_fallthru
      _
    // Predicated region
    $region18: #{decoder_fuser_pallas.5} parent=1 // pred_check
      _
    $region19: #{decoder_fuser_pallas.5} parent=1 // pred_check_branch
      %62 = sbr.rel (0) target = $region21
    $region20: #{decoder_fuser_pallas.5} parent=1 // pred_region
      %s64 = ssub.s32 16, 16
      %65 = vsyncadd [#allocation9], %s64
      %s67 = sshll.u32 [#allocation10], 4
      %s68 = int_to_ptr.vmem [resolvable:$true] %s67
      %70 = dma.hbm_to_vmem [thread:$0]  %s4, 16, %s68, [#allocation9]
    $region21: #{decoder_fuser_pallas.5} parent=1 // pred_fallthru
      _
    // Predicated region
    $region22: #{decoder_fuser_pallas.5} parent=1 // pred_check
      _
    $region23: #{decoder_fuser_pallas.5} parent=1 // pred_check_branch
      %72 = sbr.rel (0) target = $region25
    $region24: #{decoder_fuser_pallas.5} parent=1 // pred_region
      %s74 = ssub.s32 2048, 2048
      %75 = vsyncadd [#allocation12], %s74
      %s76 = sshll.u32 [#allocation11], 4
      %s77 = int_to_ptr.vmem [resolvable:$true] %s76
      %82 = dma.hbm_to_vmem [thread:$0]  %s5, 2048, %s77, [#allocation12], 128, 128, 8
    $region25: #{decoder_fuser_pallas.5} parent=1 // pred_fallthru
      _
    // Predicated region
    $region26: #{decoder_fuser_pallas.5} parent=1 // pred_check
      _
    $region27: #{decoder_fuser_pallas.5} parent=1 // pred_check_branch
      %84 = sbr.rel (0) target = $region29
    $region28: #{decoder_fuser_pallas.5} parent=1 // pred_region
      %s86 = ssub.s32 16, 16
      %87 = vsyncadd [#allocation12], %s86
      %s89 = sshll.u32 [#allocation13], 4
      %s90 = int_to_ptr.vmem [resolvable:$true] %s89
      %92 = dma.hbm_to_vmem [thread:$0]  %s6, 16, %s90, [#allocation12]
    $region29: #{decoder_fuser_pallas.5} parent=1 // pred_fallthru
      _
    // Predicated region
    $region30: #{decoder_fuser_pallas.5} parent=1 // pred_check
      _
    $region31: #{decoder_fuser_pallas.5} parent=1 // pred_check_branch
      %94 = sbr.rel (0) target = $region33
    $region32: #{decoder_fuser_pallas.5} parent=1 // pred_region
      %95 = dma.done [#allocation3], 256
    $region33: #{decoder_fuser_pallas.5} parent=1 // pred_fallthru
      _
    // Predicated region
    $region34: #{decoder_fuser_pallas.5} parent=1 // pred_check
      _
    $region35: #{decoder_fuser_pallas.5} parent=1 // pred_check_branch
      %97 = sbr.rel (0) target = $region37
    $region36: #{decoder_fuser_pallas.5} parent=1 // pred_region
      %98 = dma.done [#allocation6], 16
    $region37: #{decoder_fuser_pallas.5} parent=1 // pred_fallthru
      _
    // Predicated region
    $region38: #{decoder_fuser_pallas.5} parent=1 // pred_check
      _
    $region39: #{decoder_fuser_pallas.5} parent=1 // pred_check_branch
      %100 = sbr.rel (0) target = $region41
    $region40: #{decoder_fuser_pallas.5} parent=1 // pred_region
      %101 = dma.done [#allocation6], 16
    $region41: #{decoder_fuser_pallas.5} parent=1 // pred_fallthru
      _
    // Predicated region
    $region42: #{decoder_fuser_pallas.5} parent=1 // pred_check
      _
    $region43: #{decoder_fuser_pallas.5} parent=1 // pred_check_branch
      %103 = sbr.rel (0) target = $region45
    $region44: #{decoder_fuser_pallas.5} parent=1 // pred_region
      %104 = dma.done [#allocation9], 512
    $region45: #{decoder_fuser_pallas.5} parent=1 // pred_fallthru
      _
    // Predicated region
    $region46: #{decoder_fuser_pallas.5} parent=1 // pred_check
      _
    $region47: #{decoder_fuser_pallas.5} parent=1 // pred_check_branch
      %106 = sbr.rel (0) target = $region49
    $region48: #{decoder_fuser_pallas.5} parent=1 // pred_region
      %107 = dma.done [#allocation9], 16
    $region49: #{decoder_fuser_pallas.5} parent=1 // pred_fallthru
      _
    // Predicated region
    $region50: #{decoder_fuser_pallas.5} parent=1 // pred_check
      _
    $region51: #{decoder_fuser_pallas.5} parent=1 // pred_check_branch
      %109 = sbr.rel (0) target = $region53
    $region52: #{decoder_fuser_pallas.5} parent=1 // pred_region
      %110 = dma.done [#allocation12], 2048
    $region53: #{decoder_fuser_pallas.5} parent=1 // pred_fallthru
      _
    // Predicated region
    $region54: #{decoder_fuser_pallas.5} parent=1 // pred_check
      _
    $region55: #{decoder_fuser_pallas.5} parent=1 // pred_check_branch
      %112 = sbr.rel (0) target = $region57
    $region56: #{decoder_fuser_pallas.5} parent=1 // pred_region
      %113 = dma.done [#allocation12], 16
    $region57: #{decoder_fuser_pallas.5} parent=1 // pred_fallthru
      _
    %v114 = vld [vmem:[#allocation2] sm:$0xff]
    %v115 = vld [vmem:[#allocation2 + $0x8] sm:$0xff]
    %v116 = vld [vmem:[#allocation5] sm:$0x1]
    %v117 = vld [vmem:[#allocation7] sm:$0x1]
    %vm118 = vcmask 261120
    %v119 = vsel %vm118, %v114, 0.0
    %120 = vadd.xlane.f32.xlu0 %v119
    %v121 = vpop.xlane.xlu0 %120
    %v122 = vsel %vm118, %v115, 0.0
    %123 = vadd.xlane.f32.xlu0 %v122
    %v124 = vpop.xlane.xlu0 %123
    %v125 = vrcp.pop 32.0
    %v126 = vmul.f32 %v121, %v125
    %v127 = vmul.f32 %v124, %v125
    %v128 = vsub.f32 %v114, %v126
    %v129 = vsub.f32 %v115, %v127
    %v130 = vmul.f32 %v128, %v128
    %v131 = vmul.f32 %v129, %v129
    %v132 = vsel %vm118, %v130, 0.0
    %133 = vadd.xlane.f32.xlu0 %v132
    %v134 = vpop.xlane.xlu0 %133
    %v135 = vsel %vm118, %v131, 0.0
    %136 = vadd.xlane.f32.xlu0 %v135
    %v137 = vpop.xlane.xlu0 %136
    %v138 = vmul.f32 %v134, %v125
    %v139 = vmul.f32 %v137, %v125
    %v140 = vadd.f32 %v138, 1e-05
    %v141 = vadd.f32 %v139, 1e-05
    %v142 = vrsqrt.pop %v140
    %v143 = vrsqrt.pop %v141
    %v144 = vmul.f32 %v128, %v142
    %v145 = vmul.f32 %v129, %v143
    %v147 = vlaneseq
    %v148 = vshrl.u32 %v147, 7
    %v149 = vsub.s32 0, %v148
    %v150 = vrot.slane %v116, %v149
    %v152 = vmul.f32 %v144, %v150
    %v153 = vmul.f32 %v145, %v150
    %v155 = vlaneseq
    %v156 = vshrl.u32 %v155, 7
    %v157 = vsub.s32 0, %v156
    %v158 = vrot.slane %v117, %v157
    %v160 = vadd.f32 %v152, %v158
    %v161 = vadd.f32 %v153, %v158
    %v162 = vld [vmem:[#allocation8] sm:$0xff]
    %v163 = vld [vmem:[#allocation8 + $0x8] sm:$0xff]
    %v164 = vld [vmem:[#allocation8 + $0x10] sm:$0xff]
    %v165 = vld [vmem:[#allocation8 + $0x18] sm:$0xff]
    %v166 = vld [vmem:[#allocation10] sm:$0x1]
    %v168 = vlaneseq
    %v169 = vshrl.u32 %v168, 7
    %v170 = vsub.s32 0, %v169
    %v171 = vrot.slane %v166, %v170
    %v174 = vsel %vm118, %v160, 0
    %v177 = vsel %vm118, %v161, 0
    %179 = vmatprep.subr.mxu0 0.0
    %180 = vmatpush1.msra.mxu0 %v162
    %181 = vmatprep.subr.mxu0 0.0
    %182 = vmatpush1.msra.mxu0 %v163
    %183 = vmatprep.subr.mxu0 0.0
    %184 = vmatpush1.msra.mxu0 %v164
    %185 = vmatprep.subr.mxu0 0.0
    %186 = vmatpush1.msra.mxu0 %v165
    %187 = vmatprep.subr.mxu0 0.0
    %188 = vmatpush1.msra.mxu0 0.0
    %189 = vmatprep.subr.mxu0 0.0
    %190 = vmatpush1.msra.mxu0 0.0
    %191 = vmatprep.subr.mxu0 0.0
    %192 = vmatpush1.msra.mxu0 0.0
    %193 = vmatprep.subr.mxu0 0.0
    %194 = vmatpush1.msra.mxu0 0.0
    %195 = vmatprep.subr.mxu0 0.0
    %196 = vmatpush1.msra.mxu0 0.0
    %197 = vmatprep.subr.mxu0 0.0
    %198 = vmatpush1.msra.mxu0 0.0
    %199 = vmatprep.subr.mxu0 0.0
    %200 = vmatpush1.msra.mxu0 0.0
    %201 = vmatprep.subr.mxu0 0.0
    %202 = vmatpush1.msra.mxu0 0.0
    %203 = vmatprep.subr.mxu0 0.0
    %204 = vmatpush1.msra.mxu0 0.0
    %205 = vmatprep.subr.mxu0 0.0
    %206 = vmatpush1.msra.mxu0 0.0
    %207 = vmatprep.subr.mxu0 0.0
    %208 = vmatpush1.msra.mxu0 0.0
    %209 = vmatprep.subr.mxu0 0.0
    %210 = vmatpush1.msra.mxu0 0.0
    %211 = vmatprep.subr.mxu0 0.0
    %212 = vmatpush1.msra.mxu0 0.0
    %213 = vmatprep.subr.mxu0 0.0
    %214 = vmatpush1.msra.mxu0 0.0
    %215 = vmatprep.subr.mxu0 0.0
    %216 = vmatpush1.msra.mxu0 0.0
    %217 = vmatprep.subr.mxu0 0.0
    %218 = vmatpush1.msra.mxu0 0.0
    %219 = vmatprep.subr.mxu0 0.0
    %220 = vmatpush1.msra.mxu0 0.0
    %221 = vmatprep.subr.mxu0 0.0
    %222 = vmatpush1.msra.mxu0 0.0
    %223 = vmatprep.subr.mxu0 0.0
    %224 = vmatpush1.msra.mxu0 0.0
    %225 = vmatprep.subr.mxu0 0.0
    %226 = vmatpush1.msra.mxu0 0.0
    %227 = vmatprep.subr.mxu0 0.0
    %228 = vmatpush1.msra.mxu0 0.0
    %229 = vmatprep.subr.mxu0 0.0
    %230 = vmatpush1.msra.mxu0 0.0
    %231 = vmatprep.subr.mxu0 0.0
    %232 = vmatpush1.msra.mxu0 0.0
    %233 = vmatprep.subr.mxu0 0.0
    %234 = vmatpush1.msra.mxu0 0.0
    %235 = vmatprep.subr.mxu0 0.0
    %236 = vmatpush1.msra.mxu0 0.0
    %237 = vmatprep.subr.mxu0 0.0
    %238 = vmatpush1.msra.mxu0 0.0
    %239 = vmatprep.subr.mxu0 0.0
    %240 = vmatpush1.msra.mxu0 0.0
    %241 = vmatprep.subr.mxu0 0.0
    %242 = vmatpush1.msra.mxu0 0.0
    %243 = vmatprep.mubr.f32.mxu0 0.0
    %244 = vmatmul.mubr.f32.gmra.mrb[0].mxu0 %v174
    %v245 = vpop.f32.mrb[0].mxu0
    %v246 = vadd.f32 %v171, %v245
    %v247 = vpop.f32.mrb[0].mxu0
    %248 = vmatprep.mubr.f32.mxu0 0.0
    %249 = vmatmul.mubr.f32.gmra.mrb[0].mxu0 %v177
    %v250 = vpop.f32.mrb[0].mxu0
    %v251 = vadd.f32 %v171, %v250
    %v252 = vpop.f32.mrb[0].mxu0
    %253 = vdwg.mxu0
    %v254 = vmul.f32 %v246, 0.5
    %v255 = vmul.f32 %v251, 0.5
    %v256 = vmul.f32 %v246, 0.70710677
    %v257 = vmul.f32 %v251, 0.70710677
    %v258 = verf.f32.pop %v256
    %v259 = verf.f32.pop %v257
    %v260 = vadd.f32 %v258, 1.0
    %v261 = vadd.f32 %v259, 1.0
    %v262 = vmul.f32 %v254, %v260
    %v263 = vmul.f32 %v255, %v261
    %v264 = vld [vmem:[#allocation11] sm:$0xff]
    %v265 = vld [vmem:[#allocation11 + $0x8] sm:$0xff]
    %v266 = vld [vmem:[#allocation11 + $0x10] sm:$0xff]
    %v267 = vld [vmem:[#allocation11 + $0x18] sm:$0xff]
    %v268 = vld [vmem:[#allocation11 + $0x20] sm:$0xff]
    %v269 = vld [vmem:[#allocation11 + $0x28] sm:$0xff]
    %v270 = vld [vmem:[#allocation11 + $0x30] sm:$0xff]
    %v271 = vld [vmem:[#allocation11 + $0x38] sm:$0xff]
    %v272 = vld [vmem:[#allocation11 + $0x40] sm:$0xff]
    %v273 = vld [vmem:[#allocation11 + $0x48] sm:$0xff]
    %v274 = vld [vmem:[#allocation11 + $0x50] sm:$0xff]
    %v275 = vld [vmem:[#allocation11 + $0x58] sm:$0xff]
    %v276 = vld [vmem:[#allocation11 + $0x60] sm:$0xff]
    %v277 = vld [vmem:[#allocation11 + $0x68] sm:$0xff]
    %v278 = vld [vmem:[#allocation11 + $0x70] sm:$0xff]
    %v279 = vld [vmem:[#allocation11 + $0x78] sm:$0xff]
    %v280 = vld [vmem:[#allocation13] sm:$0x1]
    %v282 = vlaneseq
    %v283 = vshrl.u32 %v282, 7
    %v284 = vsub.s32 0, %v283
    %v285 = vrot.slane %v280, %v284
    %287 = vmatprep.subr.mxu0 0.0
    %288 = vmatpush1.msra.mxu0 %v264
    %289 = vmatprep.subr.mxu0 0.0
    %290 = vmatpush1.msra.mxu0 %v265
    %291 = vmatprep.subr.mxu0 0.0
    %292 = vmatpush1.msra.mxu0 %v266
    %293 = vmatprep.subr.mxu0 0.0
    %294 = vmatpush1.msra.mxu0 %v267
    %295 = vmatprep.subr.mxu0 0.0
    %296 = vmatpush1.msra.mxu0 %v268
    %297 = vmatprep.subr.mxu0 0.0
    %298 = vmatpush1.msra.mxu0 %v269
    %299 = vmatprep.subr.mxu0 0.0
    %300 = vmatpush1.msra.mxu0 %v270
    %301 = vmatprep.subr.mxu0 0.0
    %302 = vmatpush1.msra.mxu0 %v271
    %303 = vmatprep.subr.mxu0 0.0
    %304 = vmatpush1.msra.mxu0 %v272
    %305 = vmatprep.subr.mxu0 0.0
    %306 = vmatpush1.msra.mxu0 %v273
    %307 = vmatprep.subr.mxu0 0.0
    %308 = vmatpush1.msra.mxu0 %v274
    %309 = vmatprep.subr.mxu0 0.0
    %310 = vmatpush1.msra.mxu0 %v275
    %311 = vmatprep.subr.mxu0 0.0
    %312 = vmatpush1.msra.mxu0 %v276
    %313 = vmatprep.subr.mxu0 0.0
    %314 = vmatpush1.msra.mxu0 %v277
    %315 = vmatprep.subr.mxu0 0.0
    %316 = vmatpush1.msra.mxu0 %v278
    %317 = vmatprep.subr.mxu0 0.0
    %318 = vmatpush1.msra.mxu0 %v279
    %319 = vmatprep.subr.mxu0 0.0
    %320 = vmatpush1.msra.mxu0 0.0
    %321 = vmatprep.subr.mxu0 0.0
    %322 = vmatpush1.msra.mxu0 0.0
    %323 = vmatprep.subr.mxu0 0.0
    %324 = vmatpush1.msra.mxu0 0.0
    %325 = vmatprep.subr.mxu0 0.0
    %326 = vmatpush1.msra.mxu0 0.0
    %327 = vmatprep.subr.mxu0 0.0
    %328 = vmatpush1.msra.mxu0 0.0
    %329 = vmatprep.subr.mxu0 0.0
    %330 = vmatpush1.msra.mxu0 0.0
    %331 = vmatprep.subr.mxu0 0.0
    %332 = vmatpush1.msra.mxu0 0.0
    %333 = vmatprep.subr.mxu0 0.0
    %334 = vmatpush1.msra.mxu0 0.0
    %335 = vmatprep.subr.mxu0 0.0
    %336 = vmatpush1.msra.mxu0 0.0
    %337 = vmatprep.subr.mxu0 0.0
    %338 = vmatpush1.msra.mxu0 0.0
    %339 = vmatprep.subr.mxu0 0.0
    %340 = vmatpush1.msra.mxu0 0.0
    %341 = vmatprep.subr.mxu0 0.0
    %342 = vmatpush1.msra.mxu0 0.0
    %343 = vmatprep.subr.mxu0 0.0
    %344 = vmatpush1.msra.mxu0 0.0
    %345 = vmatprep.subr.mxu0 0.0
    %346 = vmatpush1.msra.mxu0 0.0
    %347 = vmatprep.subr.mxu0 0.0
    %348 = vmatpush1.msra.mxu0 0.0
    %349 = vmatprep.subr.mxu0 0.0
    %350 = vmatpush1.msra.mxu0 0.0
    %351 = vmatprep.mubr.f32.mxu0 0.0
    %352 = vmatmul.mubr.f32.gmra.mrb[0].mxu0 %v262
    %v353 = vpop.f32.mrb[0].mxu0
    %v354 = vadd.f32 %v285, %v353
    %v355 = vpop.f32.mrb[0].mxu0
    %356 = vmatprep.mubr.f32.mxu0 0.0
    %357 = vmatmul.mubr.f32.gmra.mrb[0].mxu0 %v263
    %v358 = vpop.f32.mrb[0].mxu0
    %v359 = vadd.f32 %v285, %v358
    %v360 = vpop.f32.mrb[0].mxu0
    %361 = vdwg.mxu0
    %v362 = vadd.f32 %v114, %v354
    %v363 = vadd.f32 %v115, %v359
    %364 = vst.msk [vmem:[#allocation14] sm:$0xff] %vm118, %v362
    %365 = vst.msk [vmem:[#allocation14 + $0x8] sm:$0xff] %vm118, %v363
    // Predicated region
    $region58: #{decoder_fuser_pallas.5} parent=1 // pred_check
      _
    $region59: #{decoder_fuser_pallas.5} parent=1 // pred_check_branch
      %367 = sbr.rel (0) target = $region61
    $region60: #{decoder_fuser_pallas.5} parent=1 // pred_region
      %s369 = ssub.s32 256, 256
      %370 = vsyncadd [#allocation4], %s369
      %s371 = sshll.u32 [#allocation14], 4
      %s372 = int_to_ptr.vmem [resolvable:$true] %s371
      %377 = dma.vmem_to_hbm [thread:$0]  %s372, 256, %s7, [#allocation4], 128, 128, 8
    $region61: #{decoder_fuser_pallas.5} parent=1 // pred_fallthru
      _
    // Predicated region
    $region62: #{decoder_fuser_pallas.5} parent=1 // pred_check
      _
    $region63: #{decoder_fuser_pallas.5} parent=1 // pred_check_branch
      %379 = sbr.rel (0) target = $region65
    $region64: #{decoder_fuser_pallas.5} parent=1 // pred_region
      %380 = dma.done [#allocation4], 256
    $region65: #{decoder_fuser_pallas.5} parent=1 // pred_fallthru
      _
    %381 = vsyncpa [#allocation3], 1
    %382 = vsyncpa [#allocation6], 1
    %383 = vsyncpa [#allocation9], 1
    %384 = vsyncpa [#allocation12], 1
    %385 = vsyncpa [#allocation4], 1

// kernel: decoder_fuser_pallas.4
$region0: #{decoder_fuser_pallas.4}
  #allocation0 [shape = 'u32[]', space=smem, size = 0x4, offset = 0x4, fixed_abs, tag = 'smem constant byte address 0x4 - core index']
  #allocation1 [shape = 'u32[144,128]{1,0:T(1,128)}', space=vmem, size = 0x12000, scoped, tag = 'internal scratch']
  #allocation2 [shape = 'f32[8,32]{1,0:T(8,128)}', space=vmem, size = 0x1000, scoped, tag = 'scratch operand']
  %s0 = inlined_call_operand.hbm [shape: f32[2,8,32], index: 0, kind: input, shape index: {}]
  %s1 = inlined_call_operand.hbm [shape: f32[1,32], index: 1, kind: input, shape index: {}]
  %s2 = inlined_call_operand.hbm [shape: f32[1,32], index: 2, kind: input, shape index: {}]
  %s3 = inlined_call_operand.hbm [shape: f32[32,32], index: 3, kind: input, shape index: {}]
  %s4 = inlined_call_operand.hbm [shape: f32[2,16,32], index: 4, kind: input, shape index: {}]
  %s5 = inlined_call_operand.hbm [shape: f32[1,32], index: 5, kind: input, shape index: {}]
  %s6 = inlined_call_operand.hbm [shape: f32[1,32], index: 6, kind: input, shape index: {}]
  %s7 = inlined_call_operand.hbm [shape: f32[32,64], index: 7, kind: input, shape index: {}]
  %s8 = inlined_call_operand.hbm [shape: f32[32,32], index: 8, kind: input, shape index: {}]
  %s9 = inlined_call_operand.hbm [shape: f32[1,32], index: 9, kind: input, shape index: {}]
  %s10 = inlined_call_operand.hbm [shape: f32[2,8,32], index: 10, kind: output, shape index: {}]
  %s11 = sld [smem:[#allocation0]]
  $region113: #{decoder_fuser_pallas.4} parent=0
    _
  %s13 = ssub.s32 1, %s11
  %s14 = scalar_select 0, %s13, %s11
  $region1: #{decoder_fuser_pallas.4} parent=0
    #allocation3 [shape = 'u8[8192]{0}', space=vmem, size = 0x2000, scoped, tag = 'input window, operand 0']
    #allocation4 [shape = 's32[2]{0}', space=sflag, size = 0x8, scoped, tag = 'scoped memory for decoder_fuser_pallas.4']
    #allocation5 [shape = 's32[2]{0}', space=sflag, size = 0x8, scoped, tag = 'scoped memory for decoder_fuser_pallas.4']
    #allocation6 [shape = 'u8[512]{0}', space=vmem, size = 0x400, scoped, tag = 'input window, operand 1, single buffered']
    #allocation7 [shape = 's32[1]{0}', space=sflag, size = 0x4, scoped, tag = 'scoped memory for decoder_fuser_pallas.4']
    #allocation8 [shape = 'u8[512]{0}', space=vmem, size = 0x400, scoped, tag = 'input window, operand 2, single buffered']
    #allocation9 [shape = 'u8[16384]{0}', space=vmem, size = 0x4000, scoped, tag = 'input window, operand 3, single buffered']
    #allocation10 [shape = 's32[1]{0}', space=sflag, size = 0x4, scoped, tag = 'scoped memory for decoder_fuser_pallas.4']
    #allocation11 [shape = 'u8[16384]{0}', space=vmem, size = 0x4000, scoped, tag = 'input window, operand 4']
    #allocation12 [shape = 'u8[512]{0}', space=vmem, size = 0x400, scoped, tag = 'input window, operand 5, single buffered']
    #allocation13 [shape = 'u8[512]{0}', space=vmem, size = 0x400, scoped, tag = 'input window, operand 6, single buffered']
    #allocation14 [shape = 'u8[16384]{0}', space=vmem, size = 0x4000, scoped, tag = 'input window, operand 7, single buffered']
    #allocation15 [shape = 's32[1]{0}', space=sflag, size = 0x4, scoped, tag = 'scoped memory for decoder_fuser_pallas.4']
    #allocation16 [shape = 'u8[16384]{0}', space=vmem, size = 0x4000, scoped, tag = 'input window, operand 8, single buffered']
    #allocation17 [shape = 'u8[512]{0}', space=vmem, size = 0x400, scoped, tag = 'input window, operand 9, single buffered']
    #allocation18 [shape = 's32[1]{0}', space=sflag, size = 0x4, scoped, tag = 'scoped memory for decoder_fuser_pallas.4']
    #allocation19 [shape = 'u8[8192]{0}', space=vmem, size = 0x2000, scoped, tag = 'output window, operand 0']
    %15 = vsyncpa [#allocation4], 0
    %s16 = scalar_lea.sflag [#allocation4], 1
    %17 = vsyncpa %s16, 0
    %18 = vsyncpa [#allocation7], 0
    %19 = vsyncpa [#allocation10], 0
    %20 = vsyncpa [#allocation15], 0
    %21 = vsyncpa [#allocation18], 0
    %22 = vsyncpa [#allocation5], 0
    %s23 = scalar_lea.sflag [#allocation5], 1
    %24 = vsyncpa %s23, 0
    loop: start=0, step=1, limit=4
    $region2: #{decoder_fuser_pallas.4} parent=1 // loop_pre_header
      _
    $region3: #{decoder_fuser_pallas.4} parent=1 // loop_header
      %s26 = sphi 0, %s30
      %p27 = scmp.ge.s32.totalorder %s26, 4
      %s33 = sphi 0, %s45
      %s34 = sphi 0, %s41
      %s35 = sphi 0, %s33
      %s36 = sphi 0, %s34
      %s37 = sphi 0, %s35
      %s38 = sphi 0, %s36
      %s50 = sphi 0, %s52
      %s53 = sphi 0, %s50
      %s54 = sphi 0, %s53
      %s70 = sphi 0, %s54
      %s74 = sphi 0, %s74
      %s76 = sphi 0, %s74
      %s77 = sphi 0, %s76
      %s91 = sphi 0, %s77
      %s95 = sphi 0, %s95
      %s97 = sphi 0, %s95
      %s98 = sphi 0, %s97
      %s112 = sphi 0, %s98
      %s116 = sphi 0, %s116
      %s118 = sphi 0, %s116
      %s119 = sphi 0, %s118
      %s133 = sphi 0, %s119
      %s139 = sphi 0, %s141
      %s142 = sphi 0, %s139
      %s143 = sphi 0, %s142
      %s159 = sphi 0, %s143
      %s163 = sphi 0, %s163
      %s165 = sphi 0, %s163
      %s166 = sphi 0, %s165
      %s180 = sphi 0, %s166
      %s184 = sphi 0, %s184
      %s186 = sphi 0, %s184
      %s187 = sphi 0, %s186
      %s201 = sphi 0, %s187
      %s205 = sphi 0, %s205
      %s207 = sphi 0, %s205
      %s208 = sphi 0, %s207
      %s222 = sphi 0, %s208
      %s226 = sphi 0, %s226
      %s228 = sphi 0, %s226
      %s229 = sphi 0, %s228
      %s243 = sphi 0, %s229
      %s247 = sphi 0, %s247
      %s249 = sphi 0, %s247
      %s250 = sphi 0, %s249
      %s264 = sphi 0, %s250
      %s272 = sphi 0, %s274
      %s275 = sphi 0, %s272
      %s276 = sphi 0, %s275
      %s292 = sphi 0, %s276
    $region4: #{decoder_fuser_pallas.4} parent=1 // loop_header_branch
      %29 = sbr.rel (%p27) target = $region8
    $region5: #{decoder_fuser_pallas.4} parent=1 // loop_body
      %s31 = ssub.s32 %s26, 1
      %s32 = ssub.s32 %s26, 2
      %s39 = sadd.s32 1, %s34
      %p40 = scmp.ge.s32.totalorder %s39, 1
      %s41 = scalar_select %p40, 0, %s39
      %s42 = sadd.s32 1, %s33
      %s43 = scalar_select %p40, %s42, %s33
      %p44 = scmp.ge.s32.totalorder %s43, 2
      %s45 = scalar_select %p44, 0, %s43
      %s46 = ssub.s32 %s33, %s45
      %s47 = ssub.s32 %s34, %s41
      %s48 = sor.u32 %s46, %s47
      %p49 = scmp.eq.s32.totalorder %s48, 0
      %s51 = sadd.s32 %s50, 1
      %s52 = scalar_select %p49, %s50, %s51
      %p55 = pneg %p49
      %p56 = scmp.eq.s32.totalorder %s26, 1
      %p57 = por %p55, %p56
      %p58 = scmp.ne.s32.totalorder %s50, %s53
      %p59 = scmp.eq.s32.totalorder %s26, 0
      %p60 = por %p58, %p59
      %p61 = scmp.ne.s32.totalorder %s50, %s53
      %p62 = scmp.eq.s32.totalorder %s31, 1
      %p63 = por %p61, %p62
      %p64 = scmp.ne.s32.totalorder %s53, %s54
      %p65 = scmp.eq.s32.totalorder %s31, 0
      %p66 = por %p64, %p65
      %p67 = scmp.ne.s32.totalorder %s53, %s54
      %p68 = scmp.eq.s32.totalorder %s32, 1
      %p69 = por %p67, %p68
      %p71 = scmp.ne.s32.totalorder %s54, %s70
      %p72 = scmp.eq.s32.totalorder %s32, 0
      %p73 = por %p71, %p72
      %s75 = sadd.s32 %s74, 1
      %p78 = scmp.eq.s32.totalorder %s26, 1
      %p79 = scmp.ne.s32.totalorder %s74, %s76
      %p80 = scmp.eq.s32.totalorder %s26, 0
      %p81 = por %p79, %p80
      %p82 = scmp.ne.s32.totalorder %s74, %s76
      %p83 = scmp.eq.s32.totalorder %s31, 1
      %p84 = por %p82, %p83
      %p85 = scmp.ne.s32.totalorder %s76, %s77
      %p86 = scmp.eq.s32.totalorder %s31, 0
      %p87 = por %p85, %p86
      %p88 = scmp.ne.s32.totalorder %s76, %s77
      %p89 = scmp.eq.s32.totalorder %s32, 1
      %p90 = por %p88, %p89
      %p92 = scmp.ne.s32.totalorder %s77, %s91
      %p93 = scmp.eq.s32.totalorder %s32, 0
      %p94 = por %p92, %p93
      %s96 = sadd.s32 %s95, 1
      %p99 = scmp.eq.s32.totalorder %s26, 1
      %p100 = scmp.ne.s32.totalorder %s95, %s97
      %p101 = scmp.eq.s32.totalorder %s26, 0
      %p102 = por %p100, %p101
      %p103 = scmp.ne.s32.totalorder %s95, %s97
      %p104 = scmp.eq.s32.totalorder %s31, 1
      %p105 = por %p103, %p104
      %p106 = scmp.ne.s32.totalorder %s97, %s98
      %p107 = scmp.eq.s32.totalorder %s31, 0
      %p108 = por %p106, %p107
      %p109 = scmp.ne.s32.totalorder %s97, %s98
      %p110 = scmp.eq.s32.totalorder %s32, 1
      %p111 = por %p109, %p110
      %p113 = scmp.ne.s32.totalorder %s98, %s112
      %p114 = scmp.eq.s32.totalorder %s32, 0
      %p115 = por %p113, %p114
      %s117 = sadd.s32 %s116, 1
      %p120 = scmp.eq.s32.totalorder %s26, 1
      %p121 = scmp.ne.s32.totalorder %s116, %s118
      %p122 = scmp.eq.s32.totalorder %s26, 0
      %p123 = por %p121, %p122
      %p124 = scmp.ne.s32.totalorder %s116, %s118
      %p125 = scmp.eq.s32.totalorder %s31, 1
      %p126 = por %p124, %p125
      %p127 = scmp.ne.s32.totalorder %s118, %s119
      %p128 = scmp.eq.s32.totalorder %s31, 0
      %p129 = por %p127, %p128
      %p130 = scmp.ne.s32.totalorder %s118, %s119
      %p131 = scmp.eq.s32.totalorder %s32, 1
      %p132 = por %p130, %p131
      %p134 = scmp.ne.s32.totalorder %s119, %s133
      %p135 = scmp.eq.s32.totalorder %s32, 0
      %p136 = por %p134, %p135
      %s137 = ssub.s32 %s33, %s45
      %p138 = scmp.eq.s32.totalorder %s137, 0
      %s140 = sadd.s32 %s139, 1
      %s141 = scalar_select %p138, %s139, %s140
      %p144 = pneg %p138
      %p145 = scmp.eq.s32.totalorder %s26, 1
      %p146 = por %p144, %p145
      %p147 = scmp.ne.s32.totalorder %s139, %s142
      %p148 = scmp.eq.s32.totalorder %s26, 0
      %p149 = por %p147, %p148
      %p150 = scmp.ne.s32.totalorder %s139, %s142
      %p151 = scmp.eq.s32.totalorder %s31, 1
      %p152 = por %p150, %p151
      %p153 = scmp.ne.s32.totalorder %s142, %s143
      %p154 = scmp.eq.s32.totalorder %s31, 0
      %p155 = por %p153, %p154
      %p156 = scmp.ne.s32.totalorder %s142, %s143
      %p157 = scmp.eq.s32.totalorder %s32, 1
      %p158 = por %p156, %p157
      %p160 = scmp.ne.s32.totalorder %s143, %s159
      %p161 = scmp.eq.s32.totalorder %s32, 0
      %p162 = por %p160, %p161
      %s164 = sadd.s32 %s163, 1
      %p167 = scmp.eq.s32.totalorder %s26, 1
      %p168 = scmp.ne.s32.totalorder %s163, %s165
      %p169 = scmp.eq.s32.totalorder %s26, 0
      %p170 = por %p168, %p169
      %p171 = scmp.ne.s32.totalorder %s163, %s165
      %p172 = scmp.eq.s32.totalorder %s31, 1
      %p173 = por %p171, %p172
      %p174 = scmp.ne.s32.totalorder %s165, %s166
      %p175 = scmp.eq.s32.totalorder %s31, 0
      %p176 = por %p174, %p175
      %p177 = scmp.ne.s32.totalorder %s165, %s166
      %p178 = scmp.eq.s32.totalorder %s32, 1
      %p179 = por %p177, %p178
      %p181 = scmp.ne.s32.totalorder %s166, %s180
      %p182 = scmp.eq.s32.totalorder %s32, 0
      %p183 = por %p181, %p182
      %s185 = sadd.s32 %s184, 1
      %p188 = scmp.eq.s32.totalorder %s26, 1
      %p189 = scmp.ne.s32.totalorder %s184, %s186
      %p190 = scmp.eq.s32.totalorder %s26, 0
      %p191 = por %p189, %p190
      %p192 = scmp.ne.s32.totalorder %s184, %s186
      %p193 = scmp.eq.s32.totalorder %s31, 1
      %p194 = por %p192, %p193
      %p195 = scmp.ne.s32.totalorder %s186, %s187
      %p196 = scmp.eq.s32.totalorder %s31, 0
      %p197 = por %p195, %p196
      %p198 = scmp.ne.s32.totalorder %s186, %s187
      %p199 = scmp.eq.s32.totalorder %s32, 1
      %p200 = por %p198, %p199
      %p202 = scmp.ne.s32.totalorder %s187, %s201
      %p203 = scmp.eq.s32.totalorder %s32, 0
      %p204 = por %p202, %p203
      %s206 = sadd.s32 %s205, 1
      %p209 = scmp.eq.s32.totalorder %s26, 1
      %p210 = scmp.ne.s32.totalorder %s205, %s207
      %p211 = scmp.eq.s32.totalorder %s26, 0
      %p212 = por %p210, %p211
      %p213 = scmp.ne.s32.totalorder %s205, %s207
      %p214 = scmp.eq.s32.totalorder %s31, 1
      %p215 = por %p213, %p214
      %p216 = scmp.ne.s32.totalorder %s207, %s208
      %p217 = scmp.eq.s32.totalorder %s31, 0
      %p218 = por %p216, %p217
      %p219 = scmp.ne.s32.totalorder %s207, %s208
      %p220 = scmp.eq.s32.totalorder %s32, 1
      %p221 = por %p219, %p220
      %p223 = scmp.ne.s32.totalorder %s208, %s222
      %p224 = scmp.eq.s32.totalorder %s32, 0
      %p225 = por %p223, %p224
      %s227 = sadd.s32 %s226, 1
      %p230 = scmp.eq.s32.totalorder %s26, 1
      %p231 = scmp.ne.s32.totalorder %s226, %s228
      %p232 = scmp.eq.s32.totalorder %s26, 0
      %p233 = por %p231, %p232
      %p234 = scmp.ne.s32.totalorder %s226, %s228
      %p235 = scmp.eq.s32.totalorder %s31, 1
      %p236 = por %p234, %p235
      %p237 = scmp.ne.s32.totalorder %s228, %s229
      %p238 = scmp.eq.s32.totalorder %s31, 0
      %p239 = por %p237, %p238
      %p240 = scmp.ne.s32.totalorder %s228, %s229
      %p241 = scmp.eq.s32.totalorder %s32, 1
      %p242 = por %p240, %p241
      %p244 = scmp.ne.s32.totalorder %s229, %s243
      %p245 = scmp.eq.s32.totalorder %s32, 0
      %p246 = por %p244, %p245
      %s248 = sadd.s32 %s247, 1
      %p251 = scmp.eq.s32.totalorder %s26, 1
      %p252 = scmp.ne.s32.totalorder %s247, %s249
      %p253 = scmp.eq.s32.totalorder %s26, 0
      %p254 = por %p252, %p253
      %p255 = scmp.ne.s32.totalorder %s247, %s249
      %p256 = scmp.eq.s32.totalorder %s31, 1
      %p257 = por %p255, %p256
      %p258 = scmp.ne.s32.totalorder %s249, %s250
      %p259 = scmp.eq.s32.totalorder %s31, 0
      %p260 = por %p258, %p259
      %p261 = scmp.ne.s32.totalorder %s249, %s250
      %p262 = scmp.eq.s32.totalorder %s32, 1
      %p263 = por %p261, %p262
      %p265 = scmp.ne.s32.totalorder %s250, %s264
      %p266 = scmp.eq.s32.totalorder %s32, 0
      %p267 = por %p265, %p266
      %s268 = ssub.s32 %s33, %s45
      %s269 = ssub.s32 %s34, %s41
      %s270 = sor.u32 %s268, %s269
      %p271 = scmp.eq.s32.totalorder %s270, 0
      %s273 = sadd.s32 %s272, 1
      %s274 = scalar_select %p271, %s272, %s273
      %p277 = pneg %p271
      %p278 = scmp.eq.s32.totalorder %s26, 1
      %p279 = por %p277, %p278
      %p280 = scmp.ne.s32.totalorder %s272, %s275
      %p281 = scmp.eq.s32.totalorder %s26, 0
      %p282 = por %p280, %p281
      %p283 = scmp.ne.s32.totalorder %s272, %s275
      %p284 = scmp.eq.s32.totalorder %s31, 1
      %p285 = por %p283, %p284
      %p286 = scmp.ne.s32.totalorder %s275, %s276
      %p287 = scmp.eq.s32.totalorder %s31, 0
      %p288 = por %p286, %p287
      %p289 = scmp.ne.s32.totalorder %s275, %s276
      %p290 = scmp.eq.s32.totalorder %s32, 1
      %p291 = por %p289, %p290
      %p293 = scmp.ne.s32.totalorder %s276, %s292
      %p294 = scmp.eq.s32.totalorder %s32, 0
      %p295 = por %p293, %p294
      %p296 = scmp.le.s32.totalorder 1, %s26
      %p297 = scmp.lt.s32.totalorder %s26, 3
      %p298 = pnand %p296, %p297
      %p299 = pneg %p298
      // Predicated region
      $region9: #{decoder_fuser_pallas.4} parent=5 // pred_check
        _
      $region10: #{decoder_fuser_pallas.4} parent=5 // pred_check_branch
        %301 = sbr.rel (%p298) target = $region12
      $region11: #{decoder_fuser_pallas.4} parent=5 // pred_region
        %s302 = ssub.s32 %s26, 1
        // Predicated region
        $region13: #{decoder_fuser_pallas.4} parent=11 // pred_check
          %p303 = pneg %p87
        $region14: #{decoder_fuser_pallas.4} parent=11 // pred_check_branch
          %305 = sbr.rel (%p303) target = $region16
        $region15: #{decoder_fuser_pallas.4} parent=11 // pred_region
          %s307 = ssub.s32 16, 16
          %308 = vsyncadd [#allocation7], %s307
          %s310 = sshll.u32 [#allocation6], 4
          %s311 = int_to_ptr.vmem [resolvable:$true] %s310
          %313 = dma.hbm_to_vmem [thread:$0]  %s1, 16, %s311, [#allocation7]
        $region16: #{decoder_fuser_pallas.4} parent=11 // pred_fallthru
          _
        // Predicated region
        $region17: #{decoder_fuser_pallas.4} parent=11 // pred_check
          %p314 = pneg %p108
        $region18: #{decoder_fuser_pallas.4} parent=11 // pred_check_branch
          %316 = sbr.rel (%p314) target = $region20
        $region19: #{decoder_fuser_pallas.4} parent=11 // pred_region
          %s318 = ssub.s32 16, 16
          %319 = vsyncadd [#allocation7], %s318
          %s321 = sshll.u32 [#allocation8], 4
          %s322 = int_to_ptr.vmem [resolvable:$true] %s321
          %324 = dma.hbm_to_vmem [thread:$0]  %s2, 16, %s322, [#allocation7]
        $region20: #{decoder_fuser_pallas.4} parent=11 // pred_fallthru
          _
        // Predicated region
        $region21: #{decoder_fuser_pallas.4} parent=11 // pred_check
          %p325 = pneg %p129
        $region22: #{decoder_fuser_pallas.4} parent=11 // pred_check_branch
          %327 = sbr.rel (%p325) target = $region24
        $region23: #{decoder_fuser_pallas.4} parent=11 // pred_region
          %s329 = ssub.s32 512, 512
          %330 = vsyncadd [#allocation10], %s329
          %s331 = sshll.u32 [#allocation9], 4
          %s332 = int_to_ptr.vmem [resolvable:$true] %s331
          %337 = dma.hbm_to_vmem [thread:$0]  %s3, 512, %s332, [#allocation10], 128, 128, 8
        $region24: #{decoder_fuser_pallas.4} parent=11 // pred_fallthru
          _
        // Predicated region
        $region25: #{decoder_fuser_pallas.4} parent=11 // pred_check
          %p338 = pneg %p176
        $region26: #{decoder_fuser_pallas.4} parent=11 // pred_check_branch
          %340 = sbr.rel (%p338) target = $region28
        $region27: #{decoder_fuser_pallas.4} parent=11 // pred_region
          %s342 = ssub.s32 16, 16
          %343 = vsyncadd [#allocation7], %s342
          %s345 = sshll.u32 [#allocation12], 4
          %s346 = int_to_ptr.vmem [resolvable:$true] %s345
          %348 = dma.hbm_to_vmem [thread:$0]  %s5, 16, %s346, [#allocation7]
        $region28: #{decoder_fuser_pallas.4} parent=11 // pred_fallthru
          _
        // Predicated region
        $region29: #{decoder_fuser_pallas.4} parent=11 // pred_check
          %p349 = pneg %p197
        $region30: #{decoder_fuser_pallas.4} parent=11 // pred_check_branch
          %351 = sbr.rel (%p349) target = $region32
        $region31: #{decoder_fuser_pallas.4} parent=11 // pred_region
          %s353 = ssub.s32 16, 16
          %354 = vsyncadd [#allocation10], %s353
          %s356 = sshll.u32 [#allocation13], 4
          %s357 = int_to_ptr.vmem [resolvable:$true] %s356
          %359 = dma.hbm_to_vmem [thread:$0]  %s6, 16, %s357, [#allocation10]
        $region32: #{decoder_fuser_pallas.4} parent=11 // pred_fallthru
          _
        // Predicated region
        $region33: #{decoder_fuser_pallas.4} parent=11 // pred_check
          %p360 = pneg %p218
        $region34: #{decoder_fuser_pallas.4} parent=11 // pred_check_branch
          %362 = sbr.rel (%p360) target = $region36
        $region35: #{decoder_fuser_pallas.4} parent=11 // pred_region
          %s364 = ssub.s32 512, 512
          %365 = vsyncadd [#allocation15], %s364
          %s366 = sshll.u32 [#allocation14], 4
          %s367 = int_to_ptr.vmem [resolvable:$true] %s366
          %372 = dma.hbm_to_vmem [thread:$0]  %s7, 512, %s367, [#allocation15], 128, 128, 8
        $region36: #{decoder_fuser_pallas.4} parent=11 // pred_fallthru
          _
        // Predicated region
        $region37: #{decoder_fuser_pallas.4} parent=11 // pred_check
          %p373 = pneg %p239
        $region38: #{decoder_fuser_pallas.4} parent=11 // pred_check_branch
          %375 = sbr.rel (%p373) target = $region40
        $region39: #{decoder_fuser_pallas.4} parent=11 // pred_region
          %s377 = ssub.s32 512, 512
          %378 = vsyncadd [#allocation15], %s377
          %s379 = sshll.u32 [#allocation16], 4
          %s380 = int_to_ptr.vmem [resolvable:$true] %s379
          %385 = dma.hbm_to_vmem [thread:$0]  %s8, 512, %s380, [#allocation15], 128, 128, 8
        $region40: #{decoder_fuser_pallas.4} parent=11 // pred_fallthru
          _
        // Predicated region
        $region41: #{decoder_fuser_pallas.4} parent=11 // pred_check
          %p386 = pneg %p260
        $region42: #{decoder_fuser_pallas.4} parent=11 // pred_check_branch
          %388 = sbr.rel (%p386) target = $region44
        $region43: #{decoder_fuser_pallas.4} parent=11 // pred_region
          %s390 = ssub.s32 16, 16
          %391 = vsyncadd [#allocation18], %s390
          %s393 = sshll.u32 [#allocation17], 4
          %s394 = int_to_ptr.vmem [resolvable:$true] %s393
          %396 = dma.hbm_to_vmem [thread:$0]  %s9, 16, %s394, [#allocation18]
        $region44: #{decoder_fuser_pallas.4} parent=11 // pred_fallthru
          _
      $region12: #{decoder_fuser_pallas.4} parent=5 // pred_fallthru
        _
      %p397 = scmp.lt.s32.totalorder %s26, 2
      // Predicated region
      $region45: #{decoder_fuser_pallas.4} parent=5 // pred_check
        %p398 = pneg %p397
      $region46: #{decoder_fuser_pallas.4} parent=5 // pred_check_branch
        %400 = sbr.rel (%p398) target = $region48
      $region47: #{decoder_fuser_pallas.4} parent=5 // pred_region
        // Predicated region
        $region49: #{decoder_fuser_pallas.4} parent=47 // pred_check
          %p401 = pneg %p60
        $region50: #{decoder_fuser_pallas.4} parent=47 // pred_check_branch
          %403 = sbr.rel (%p401) target = $region52
        $region51: #{decoder_fuser_pallas.4} parent=47 // pred_region
          %s404 = sand.u32 %s26, 1
          %s405 = scalar_lea.sflag [#allocation4], %s404
          %s406 = sand.u32 %s50, 1
          %s407 = smul.addr %s406, 8
          %s408 = scalar_lea.vmem [#allocation3], %s407
          %s410 = ssub.s32 128, 128
          %411 = vsyncadd %s405, %s410
          %s412 = sadd.s32 %s34, %s33
          %s413 = smul.addr %s412, 128
          %s414 = scalar_lea.hbm %s0, %s413
          %s416 = sshll.u32 %s408, 4
          %s417 = int_to_ptr.vmem [resolvable:$true] %s416
          %419 = dma.hbm_to_vmem [thread:$0]  %s414, 128, %s417, %s405
        $region52: #{decoder_fuser_pallas.4} parent=47 // pred_fallthru
          _
        // Predicated region
        $region53: #{decoder_fuser_pallas.4} parent=47 // pred_check
          %p420 = pneg %p149
        $region54: #{decoder_fuser_pallas.4} parent=47 // pred_check_branch
          %422 = sbr.rel (%p420) target = $region56
        $region55: #{decoder_fuser_pallas.4} parent=47 // pred_region
          %s423 = sand.u32 %s26, 1
          %s424 = scalar_lea.sflag [#allocation4], %s423
          %s425 = sand.u32 %s139, 1
          %s426 = smul.addr %s425, 16
          %s427 = scalar_lea.vmem [#allocation11], %s426
          %s429 = ssub.s32 256, 256
          %430 = vsyncadd %s424, %s429
          %s431 = smul.addr %s33, 2
          %s432 = smul.addr %s431, 128
          %s433 = scalar_lea.hbm %s4, %s432
          %s434 = sshll.u32 %s427, 4
          %s435 = int_to_ptr.vmem [resolvable:$true] %s434
          %440 = dma.hbm_to_vmem [thread:$0]  %s433, 256, %s435, %s424, 128, 128, 8
        $region56: #{decoder_fuser_pallas.4} parent=47 // pred_fallthru
          _
      $region48: #{decoder_fuser_pallas.4} parent=5 // pred_fallthru
        _
      %p441 = scmp.le.s32.totalorder 1, %s26
      %p442 = scmp.lt.s32.totalorder %s26, 3
      %p443 = pnand %p441, %p442
      %p444 = pneg %p443
      // Predicated region
      $region57: #{decoder_fuser_pallas.4} parent=5 // pred_check
        _
      $region58: #{decoder_fuser_pallas.4} parent=5 // pred_check_branch
        %446 = sbr.rel (%p443) target = $region60
      $region59: #{decoder_fuser_pallas.4} parent=5 // pred_region
        %s447 = ssub.s32 %s26, 1
        %s448 = sand.u32 %s31, 1
        %s449 = scalar_lea.sflag [#allocation4], %s448
        %s450 = sand.u32 %s53, 1
        %s451 = smul.addr %s450, 8
        %s452 = scalar_lea.vmem [#allocation3], %s451
        // Predicated region
        $region61: #{decoder_fuser_pallas.4} parent=59 // pred_check
          %p453 = pneg %p66
        $region62: #{decoder_fuser_pallas.4} parent=59 // pred_check_branch
          %455 = sbr.rel (%p453) target = $region64
        $region63: #{decoder_fuser_pallas.4} parent=59 // pred_region
          %456 = dma.done %s449, 128
        $region64: #{decoder_fuser_pallas.4} parent=59 // pred_fallthru
          _
        // Predicated region
        $region65: #{decoder_fuser_pallas.4} parent=59 // pred_check
          %p457 = pneg %p87
        $region66: #{decoder_fuser_pallas.4} parent=59 // pred_check_branch
          %459 = sbr.rel (%p457) target = $region68
        $region67: #{decoder_fuser_pallas.4} parent=59 // pred_region
          %460 = dma.done [#allocation7], 16
        $region68: #{decoder_fuser_pallas.4} parent=59 // pred_fallthru
          _
        // Predicated region
        $region69: #{decoder_fuser_pallas.4} parent=59 // pred_check
          %p461 = pneg %p108
        $region70: #{decoder_fuser_pallas.4} parent=59 // pred_check_branch
          %463 = sbr.rel (%p461) target = $region72
        $region71: #{decoder_fuser_pallas.4} parent=59 // pred_region
          %464 = dma.done [#allocation7], 16
        $region72: #{decoder_fuser_pallas.4} parent=59 // pred_fallthru
          _
        // Predicated region
        $region73: #{decoder_fuser_pallas.4} parent=59 // pred_check
          %p465 = pneg %p129
        $region74: #{decoder_fuser_pallas.4} parent=59 // pred_check_branch
          %467 = sbr.rel (%p465) target = $region76
        $region75: #{decoder_fuser_pallas.4} parent=59 // pred_region
          %468 = dma.done [#allocation10], 512
        $region76: #{decoder_fuser_pallas.4} parent=59 // pred_fallthru
          _
        %s469 = sand.u32 %s31, 1
        %s470 = scalar_lea.sflag [#allocation4], %s469
        %s471 = sand.u32 %s142, 1
        %s472 = smul.addr %s471, 16
        %s473 = scalar_lea.vmem [#allocation11], %s472
        // Predicated region
        $region77: #{decoder_fuser_pallas.4} parent=59 // pred_check
          %p474 = pneg %p155
        $region78: #{decoder_fuser_pallas.4} parent=59 // pred_check_branch
          %476 = sbr.rel (%p474) target = $region80
        $region79: #{decoder_fuser_pallas.4} parent=59 // pred_region
          %477 = dma.done %s470, 256
        $region80: #{decoder_fuser_pallas.4} parent=59 // pred_fallthru
          _
        // Predicated region
        $region81: #{decoder_fuser_pallas.4} parent=59 // pred_check
          %p478 = pneg %p176
        $region82: #{decoder_fuser_pallas.4} parent=59 // pred_check_branch
          %480 = sbr.rel (%p478) target = $region84
        $region83: #{decoder_fuser_pallas.4} parent=59 // pred_region
          %481 = dma.done [#allocation7], 16
        $region84: #{decoder_fuser_pallas.4} parent=59 // pred_fallthru
          _
        // Predicated region
        $region85: #{decoder_fuser_pallas.4} parent=59 // pred_check
          %p482 = pneg %p197
        $region86: #{decoder_fuser_pallas.4} parent=59 // pred_check_branch
          %484 = sbr.rel (%p482) target = $region88
        $region87: #{decoder_fuser_pallas.4} parent=59 // pred_region
          %485 = dma.done [#allocation10], 16
        $region88: #{decoder_fuser_pallas.4} parent=59 // pred_fallthru
          _
        // Predicated region
        $region89: #{decoder_fuser_pallas.4} parent=59 // pred_check
          %p486 = pneg %p218
        $region90: #{decoder_fuser_pallas.4} parent=59 // pred_check_branch
          %488 = sbr.rel (%p486) target = $region92
        $region91: #{decoder_fuser_pallas.4} parent=59 // pred_region
          %489 = dma.done [#allocation15], 512
        $region92: #{decoder_fuser_pallas.4} parent=59 // pred_fallthru
          _
        // Predicated region
        $region93: #{decoder_fuser_pallas.4} parent=59 // pred_check
          %p490 = pneg %p239
        $region94: #{decoder_fuser_pallas.4} parent=59 // pred_check_branch
          %492 = sbr.rel (%p490) target = $region96
        $region95: #{decoder_fuser_pallas.4} parent=59 // pred_region
          %493 = dma.done [#allocation15], 512
        $region96: #{decoder_fuser_pallas.4} parent=59 // pred_fallthru
          _
        // Predicated region
        $region97: #{decoder_fuser_pallas.4} parent=59 // pred_check
          %p494 = pneg %p260
        $region98: #{decoder_fuser_pallas.4} parent=59 // pred_check_branch
          %496 = sbr.rel (%p494) target = $region100
        $region99: #{decoder_fuser_pallas.4} parent=59 // pred_region
          %497 = dma.done [#allocation18], 16
        $region100: #{decoder_fuser_pallas.4} parent=59 // pred_fallthru
          _
        %s498 = sand.u32 %s31, 1
        %s499 = scalar_lea.sflag [#allocation4], %s498
        %s500 = sand.u32 %s53, 1
        %s501 = smul.addr %s500, 8
        %s502 = scalar_lea.vmem [#allocation3], %s501
        %p503 = pneg %p66
        %p504 = pneg %p63
        %p505 = pneg %p87
        %p506 = pneg %p84
        %p507 = pneg %p108
        %p508 = pneg %p105
        %p509 = pneg %p129
        %p510 = pneg %p126
        %s511 = sand.u32 %s31, 1
        %s512 = scalar_lea.sflag [#allocation4], %s511
        %s513 = sand.u32 %s142, 1
        %s514 = smul.addr %s513, 16
        %s515 = scalar_lea.vmem [#allocation11], %s514
        %p516 = pneg %p155
        %p517 = pneg %p152
        %p518 = pneg %p176
        %p519 = pneg %p173
        %p520 = pneg %p197
        %p521 = pneg %p194
        %p522 = pneg %p218
        %p523 = pneg %p215
        %p524 = pneg %p239
        %p525 = pneg %p236
        %p526 = pneg %p260
        %p527 = pneg %p257
        %p528 = pneg %p288
        %p529 = pneg %p285
        %s530 = sand.u32 %s275, 1
        %s531 = scalar_lea.sflag [#allocation5], %s530
        %s532 = sand.u32 %s275, 1
        %s533 = smul.addr %s532, 8
        %s534 = scalar_lea.vmem [#allocation19], %s533
        %v535 = vld [vmem:[%s452] sm:$0xff]
        %v536 = vld [vmem:[%s473] sm:$0xff]
        %v537 = vld [vmem:[%s473 + $0x8] sm:$0xff]
        %v538 = vld [vmem:[#allocation12] sm:$0x1]
        %v539 = vld [vmem:[#allocation13] sm:$0x1]
        %vm540 = vcmask 261120
        %v541 = vsel %vm540, %v536, 0.0
        %542 = vadd.xlane.f32.xlu0 %v541
        %v543 = vpop.xlane.xlu0 %542
        %v544 = vsel %vm540, %v537, 0.0
        %545 = vadd.xlane.f32.xlu0 %v544
        %v546 = vpop.xlane.xlu0 %545
        %v547 = vrcp.pop 32.0
        %v548 = vmul.f32 %v543, %v547
        %v549 = vmul.f32 %v546, %v547
        %v550 = vsub.f32 %v536, %v548
        %v551 = vsub.f32 %v537, %v549
        %v552 = vmul.f32 %v550, %v550
        %v553 = vmul.f32 %v551, %v551
        %v554 = vsel %vm540, %v552, 0.0
        %555 = vadd.xlane.f32.xlu0 %v554
        %v556 = vpop.xlane.xlu0 %555
        %v557 = vsel %vm540, %v553, 0.0
        %558 = vadd.xlane.f32.xlu0 %v557
        %v559 = vpop.xlane.xlu0 %558
        %v560 = vmul.f32 %v556, %v547
        %v561 = vmul.f32 %v559, %v547
        %v562 = vadd.f32 %v560, 1e-05
        %v563 = vadd.f32 %v561, 1e-05
        %v564 = vrsqrt.pop %v562
        %v565 = vrsqrt.pop %v563
        %v566 = vmul.f32 %v550, %v564
        %v567 = vmul.f32 %v551, %v565
        %v569 = vlaneseq
        %v570 = vshrl.u32 %v569, 7
        %v571 = vsub.s32 0, %v570
        %v572 = vrot.slane %v538, %v571
        %v574 = vmul.f32 %v566, %v572
        %v575 = vmul.f32 %v567, %v572
        %v577 = vlaneseq
        %v578 = vshrl.u32 %v577, 7
        %v579 = vsub.s32 0, %v578
        %v580 = vrot.slane %v539, %v579
        %v582 = vadd.f32 %v574, %v580
        %v583 = vadd.f32 %v575, %v580
        %v584 = vld [vmem:[#allocation14] sm:$0xff]
        %v585 = vld [vmem:[#allocation14 + $0x8] sm:$0xff]
        %v586 = vld [vmem:[#allocation14 + $0x10] sm:$0xff]
        %v587 = vld [vmem:[#allocation14 + $0x18] sm:$0xff]
        %v589 = vsel %vm540, %v582, 0
        %v592 = vsel %vm540, %v583, 0
        %594 = vmatprep.subr.mxu0 0.0
        %595 = vmatpush1.msra.mxu0 %v584
        %596 = vmatprep.subr.mxu0 0.0
        %597 = vmatpush1.msra.mxu0 %v585
        %598 = vmatprep.subr.mxu0 0.0
        %599 = vmatpush1.msra.mxu0 %v586
        %600 = vmatprep.subr.mxu0 0.0
        %601 = vmatpush1.msra.mxu0 %v587
        %602 = vmatprep.subr.mxu0 0.0
        %603 = vmatpush1.msra.mxu0 0.0
        %604 = vmatprep.subr.mxu0 0.0
        %605 = vmatpush1.msra.mxu0 0.0
        %606 = vmatprep.subr.mxu0 0.0
        %607 = vmatpush1.msra.mxu0 0.0
        %608 = vmatprep.subr.mxu0 0.0
        %609 = vmatpush1.msra.mxu0 0.0
        %610 = vmatprep.subr.mxu0 0.0
        %611 = vmatpush1.msra.mxu0 0.0
        %612 = vmatprep.subr.mxu0 0.0
        %613 = vmatpush1.msra.mxu0 0.0
        %614 = vmatprep.subr.mxu0 0.0
        %615 = vmatpush1.msra.mxu0 0.0
        %616 = vmatprep.subr.mxu0 0.0
        %617 = vmatpush1.msra.mxu0 0.0
        %618 = vmatprep.subr.mxu0 0.0
        %619 = vmatpush1.msra.mxu0 0.0
        %620 = vmatprep.subr.mxu0 0.0
        %621 = vmatpush1.msra.mxu0 0.0
        %622 = vmatprep.subr.mxu0 0.0
        %623 = vmatpush1.msra.mxu0 0.0
        %624 = vmatprep.subr.mxu0 0.0
        %625 = vmatpush1.msra.mxu0 0.0
        %626 = vmatprep.subr.mxu0 0.0
        %627 = vmatpush1.msra.mxu0 0.0
        %628 = vmatprep.subr.mxu0 0.0
        %629 = vmatpush1.msra.mxu0 0.0
        %630 = vmatprep.subr.mxu0 0.0
        %631 = vmatpush1.msra.mxu0 0.0
        %632 = vmatprep.subr.mxu0 0.0
        %633 = vmatpush1.msra.mxu0 0.0
        %634 = vmatprep.subr.mxu0 0.0
        %635 = vmatpush1.msra.mxu0 0.0
        %636 = vmatprep.subr.mxu0 0.0
        %637 = vmatpush1.msra.mxu0 0.0
        %638 = vmatprep.subr.mxu0 0.0
        %639 = vmatpush1.msra.mxu0 0.0
        %640 = vmatprep.subr.mxu0 0.0
        %641 = vmatpush1.msra.mxu0 0.0
        %642 = vmatprep.subr.mxu0 0.0
        %643 = vmatpush1.msra.mxu0 0.0
        %644 = vmatprep.subr.mxu0 0.0
        %645 = vmatpush1.msra.mxu0 0.0
        %646 = vmatprep.subr.mxu0 0.0
        %647 = vmatpush1.msra.mxu0 0.0
        %648 = vmatprep.subr.mxu0 0.0
        %649 = vmatpush1.msra.mxu0 0.0
        %650 = vmatprep.subr.mxu0 0.0
        %651 = vmatpush1.msra.mxu0 0.0
        %652 = vmatprep.subr.mxu0 0.0
        %653 = vmatpush1.msra.mxu0 0.0
        %654 = vmatprep.subr.mxu0 0.0
        %655 = vmatpush1.msra.mxu0 0.0
        %656 = vmatprep.subr.mxu0 0.0
        %657 = vmatpush1.msra.mxu0 0.0
        %658 = vmatprep.mubr.f32.mxu0 0.0
        %659 = vmatmul.mubr.f32.gmra.mrb[0].mxu0 %v589
        %v660 = vpop.f32.mrb[0].mxu0
        %v661 = vadd.f32 0.0, %v660
        %v662 = vpop.f32.mrb[0].mxu0
        %663 = vmatprep.mubr.f32.mxu0 0.0
        %664 = vmatmul.mubr.f32.gmra.mrb[0].mxu0 %v592
        %v665 = vpop.f32.mrb[0].mxu0
        %v666 = vadd.f32 0.0, %v665
        %v667 = vpop.f32.mrb[0].mxu0
        %668 = vdwg.mxu0
        %v669 = vld [vmem:[#allocation6] sm:$0x1]
        %v670 = vld [vmem:[#allocation8] sm:$0x1]
        %v671 = vsel %vm540, %v535, 0.0
        %672 = vadd.xlane.f32.xlu0 %v671
        %v673 = vpop.xlane.xlu0 %672
        %v674 = vmul.f32 %v673, %v547
        %v675 = vsub.f32 %v535, %v674
        %v676 = vmul.f32 %v675, %v675
        %v677 = vsel %vm540, %v676, 0.0
        %678 = vadd.xlane.f32.xlu0 %v677
        %v679 = vpop.xlane.xlu0 %678
        %v680 = vmul.f32 %v679, %v547
        %v681 = vadd.f32 %v680, 1e-05
        %v682 = vrsqrt.pop %v681
        %v683 = vmul.f32 %v675, %v682
        %v685 = vlaneseq
        %v686 = vshrl.u32 %v685, 7
        %v687 = vsub.s32 0, %v686
        %v688 = vrot.slane %v669, %v687
        %v690 = vmul.f32 %v683, %v688
        %v692 = vlaneseq
        %v693 = vshrl.u32 %v692, 7
        %v694 = vsub.s32 0, %v693
        %v695 = vrot.slane %v670, %v694
        %v697 = vadd.f32 %v690, %v695
        %v698 = vld [vmem:[#allocation9] sm:$0xff]
        %v699 = vld [vmem:[#allocation9 + $0x8] sm:$0xff]
        %v700 = vld [vmem:[#allocation9 + $0x10] sm:$0xff]
        %v701 = vld [vmem:[#allocation9 + $0x18] sm:$0xff]
        %v703 = vsel %vm540, %v697, 0
        %705 = vmatprep.subr.mxu0 0.0
        %706 = vmatpush1.msra.mxu0 %v698
        %707 = vmatprep.subr.mxu0 0.0
        %708 = vmatpush1.msra.mxu0 %v699
        %709 = vmatprep.subr.mxu0 0.0
        %710 = vmatpush1.msra.mxu0 %v700
        %711 = vmatprep.subr.mxu0 0.0
        %712 = vmatpush1.msra.mxu0 %v701
        %713 = vmatprep.subr.mxu0 0.0
        %714 = vmatpush1.msra.mxu0 0.0
        %715 = vmatprep.subr.mxu0 0.0
        %716 = vmatpush1.msra.mxu0 0.0
        %717 = vmatprep.subr.mxu0 0.0
        %718 = vmatpush1.msra.mxu0 0.0
        %719 = vmatprep.subr.mxu0 0.0
        %720 = vmatpush1.msra.mxu0 0.0
        %721 = vmatprep.subr.mxu0 0.0
        %722 = vmatpush1.msra.mxu0 0.0
        %723 = vmatprep.subr.mxu0 0.0
        %724 = vmatpush1.msra.mxu0 0.0
        %725 = vmatprep.subr.mxu0 0.0
        %726 = vmatpush1.msra.mxu0 0.0
        %727 = vmatprep.subr.mxu0 0.0
        %728 = vmatpush1.msra.mxu0 0.0
        %729 = vmatprep.subr.mxu0 0.0
        %730 = vmatpush1.msra.mxu0 0.0
        %731 = vmatprep.subr.mxu0 0.0
        %732 = vmatpush1.msra.mxu0 0.0
        %733 = vmatprep.subr.mxu0 0.0
        %734 = vmatpush1.msra.mxu0 0.0
        %735 = vmatprep.subr.mxu0 0.0
        %736 = vmatpush1.msra.mxu0 0.0
        %737 = vmatprep.subr.mxu0 0.0
        %738 = vmatpush1.msra.mxu0 0.0
        %739 = vmatprep.subr.mxu0 0.0
        %740 = vmatpush1.msra.mxu0 0.0
        %741 = vmatprep.subr.mxu0 0.0
        %742 = vmatpush1.msra.mxu0 0.0
        %743 = vmatprep.subr.mxu0 0.0
        %744 = vmatpush1.msra.mxu0 0.0
        %745 = vmatprep.subr.mxu0 0.0
        %746 = vmatpush1.msra.mxu0 0.0
        %747 = vmatprep.subr.mxu0 0.0
        %748 = vmatpush1.msra.mxu0 0.0
        %749 = vmatprep.subr.mxu0 0.0
        %750 = vmatpush1.msra.mxu0 0.0
        %751 = vmatprep.subr.mxu0 0.0
        %752 = vmatpush1.msra.mxu0 0.0
        %753 = vmatprep.subr.mxu0 0.0
        %754 = vmatpush1.msra.mxu0 0.0
        %755 = vmatprep.subr.mxu0 0.0
        %756 = vmatpush1.msra.mxu0 0.0
        %757 = vmatprep.subr.mxu0 0.0
        %758 = vmatpush1.msra.mxu0 0.0
        %759 = vmatprep.subr.mxu0 0.0
        %760 = vmatpush1.msra.mxu0 0.0
        %761 = vmatprep.subr.mxu0 0.0
        %762 = vmatpush1.msra.mxu0 0.0
        %763 = vmatprep.subr.mxu0 0.0
        %764 = vmatpush1.msra.mxu0 0.0
        %765 = vmatprep.subr.mxu0 0.0
        %766 = vmatpush1.msra.mxu0 0.0
        %767 = vmatprep.subr.mxu0 0.0
        %768 = vmatpush1.msra.mxu0 0.0
        %769 = vmatprep.mubr.f32.mxu0 0.0
        %770 = vmatmul.mubr.f32.gmra.mrb[0].mxu0 %v703
        %v771 = vpop.f32.mrb[0].mxu0
        %v772 = vadd.f32 0.0, %v771
        %v773 = vpop.f32.mrb[0].mxu0
        %774 = vdwg.mxu0
        %v775 = vmul.f32 %v772, 0.35355338
        %vm776 = vcmask 64512
        %v778 = vsel %vm776, %v775, 0
        %v781 = vsel %vm776, %v661, 0
        %v784 = vsel %vm776, %v666, 0
        %786 = vmatprep.subr.mxu0 0.0
        %787 = vmatpush1.xpose.msra.mxu0 %v781
        %788 = vmatprep.subr.mxu0 0.0
        %789 = vmatpush1.xpose.msra.mxu0 %v784
        %790 = vmatprep.subr.mxu0 0.0
        %791 = vmatpush1.xpose.msra.mxu0 0.0
        %792 = vmatprep.subr.mxu0 0.0
        %793 = vmatpush1.xpose.msra.mxu0 0.0
        %794 = vmatprep.subr.mxu0 0.0
        %795 = vmatpush1.xpose.msra.mxu0 0.0
        %796 = vmatprep.subr.mxu0 0.0
        %797 = vmatpush1.xpose.msra.mxu0 0.0
        %798 = vmatprep.subr.mxu0 0.0
        %799 = vmatpush1.xpose.msra.mxu0 0.0
        %800 = vmatprep.subr.mxu0 0.0
        %801 = vmatpush1.xpose.msra.mxu0 0.0
        %802 = vmatprep.subr.mxu0 0.0
        %803 = vmatpush1.xpose.msra.mxu0 0.0
        %804 = vmatprep.subr.mxu0 0.0
        %805 = vmatpush1.xpose.msra.mxu0 0.0
        %806 = vmatprep.subr.mxu0 0.0
        %807 = vmatpush1.xpose.msra.mxu0 0.0
        %808 = vmatprep.subr.mxu0 0.0
        %809 = vmatpush1.xpose.msra.mxu0 0.0
        %810 = vmatprep.subr.mxu0 0.0
        %811 = vmatpush1.xpose.msra.mxu0 0.0
        %812 = vmatprep.subr.mxu0 0.0
        %813 = vmatpush1.xpose.msra.mxu0 0.0
        %814 = vmatprep.subr.mxu0 0.0
        %815 = vmatpush1.xpose.msra.mxu0 0.0
        %816 = vmatprep.subr.mxu0 0.0
        %817 = vmatpush1.xpose.msra.mxu0 0.0
        %818 = vmatprep.subr.mxu0 0.0
        %819 = vmatpush1.xpose.msra.mxu0 0.0
        %820 = vmatprep.subr.mxu0 0.0
        %821 = vmatpush1.xpose.msra.mxu0 0.0
        %822 = vmatprep.subr.mxu0 0.0
        %823 = vmatpush1.xpose.msra.mxu0 0.0
        %824 = vmatprep.subr.mxu0 0.0
        %825 = vmatpush1.xpose.msra.mxu0 0.0
        %826 = vmatprep.subr.mxu0 0.0
        %827 = vmatpush1.xpose.msra.mxu0 0.0
        %828 = vmatprep.subr.mxu0 0.0
        %829 = vmatpush1.xpose.msra.mxu0 0.0
        %830 = vmatprep.subr.mxu0 0.0
        %831 = vmatpush1.xpose.msra.mxu0 0.0
        %832 = vmatprep.subr.mxu0 0.0
        %833 = vmatpush1.xpose.msra.mxu0 0.0
        %834 = vmatprep.subr.mxu0 0.0
        %835 = vmatpush1.xpose.msra.mxu0 0.0
        %836 = vmatprep.subr.mxu0 0.0
        %837 = vmatpush1.xpose.msra.mxu0 0.0
        %838 = vmatprep.subr.mxu0 0.0
        %839 = vmatpush1.xpose.msra.mxu0 0.0
        %840 = vmatprep.subr.mxu0 0.0
        %841 = vmatpush1.xpose.msra.mxu0 0.0
        %842 = vmatprep.subr.mxu0 0.0
        %843 = vmatpush1.xpose.msra.mxu0 0.0
        %844 = vmatprep.subr.mxu0 0.0
        %845 = vmatpush1.xpose.msra.mxu0 0.0
        %846 = vmatprep.subr.mxu0 0.0
        %847 = vmatpush1.xpose.msra.mxu0 0.0
        %848 = vmatprep.subr.mxu0 0.0
        %849 = vmatpush1.xpose.msra.mxu0 0.0
        %850 = vmatprep.mubr.f32.mxu0 0.0
        %851 = vmatmul.mubr.f32.gmra.mrb[0].mxu0 %v778
        %v852 = vpop.f32.mrb[0].mxu0
        %v853 = vadd.f32 0.0, %v852
        %v854 = vpop.f32.mrb[0].mxu0
        %855 = vdwg.mxu0
        %vm856 = vcmask 130048
        %v857 = vsel %vm856, %v853, -inf
        %858 = vmax.xlane.f32.xlu0 %v857
        %v859 = vpop.xlane.xlu0 %858
        %v860 = vsub.f32 %v853, %v859
        %v861 = vmul.f32 %v860, 1.442695
        %v862 = vpow.pop %v861
        %v863 = vsel %vm856, %v862, 0.0
        %864 = vadd.xlane.f32.xlu0 %v863
        %v865 = vpop.xlane.xlu0 %864
        %v866 = vrcp.pop %v865
        %v867 = vmul.f32 1.0, %v866
        %868 = vrot.lane.b32.xlu0 %v661, 96
        %v869 = vpop.permute.xlu0 %868
        %870 = vrot.lane.b32.xlu0 %v666, 96
        %v871 = vpop.permute.xlu0 %870
        %v875 = vsel %vm856, %v862, 0
        %877 = vmatprep.subr.mxu0 0.0
        %878 = vmatpush1.msra.mxu0 %v869
        %879 = vmatprep.subr.mxu0 0.0
        %880 = vmatpush1.msra.mxu0 %v871
        %881 = vmatprep.subr.mxu0 0.0
        %882 = vmatpush1.msra.mxu0 0.0
        %883 = vmatprep.subr.mxu0 0.0
        %884 = vmatpush1.msra.mxu0 0.0
        %885 = vmatprep.subr.mxu0 0.0
        %886 = vmatpush1.msra.mxu0 0.0
        %887 = vmatprep.subr.mxu0 0.0
        %888 = vmatpush1.msra.mxu0 0.0
        %889 = vmatprep.subr.mxu0 0.0
        %890 = vmatpush1.msra.mxu0 0.0
        %891 = vmatprep.subr.mxu0 0.0
        %892 = vmatpush1.msra.mxu0 0.0
        %893 = vmatprep.subr.mxu0 0.0
        %894 = vmatpush1.msra.mxu0 0.0
        %895 = vmatprep.subr.mxu0 0.0
        %896 = vmatpush1.msra.mxu0 0.0
        %897 = vmatprep.subr.mxu0 0.0
        %898 = vmatpush1.msra.mxu0 0.0
        %899 = vmatprep.subr.mxu0 0.0
        %900 = vmatpush1.msra.mxu0 0.0
        %901 = vmatprep.subr.mxu0 0.0
        %902 = vmatpush1.msra.mxu0 0.0
        %903 = vmatprep.subr.mxu0 0.0
        %904 = vmatpush1.msra.mxu0 0.0
        %905 = vmatprep.subr.mxu0 0.0
        %906 = vmatpush1.msra.mxu0 0.0
        %907 = vmatprep.subr.mxu0 0.0
        %908 = vmatpush1.msra.mxu0 0.0
        %909 = vmatprep.subr.mxu0 0.0
        %910 = vmatpush1.msra.mxu0 0.0
        %911 = vmatprep.subr.mxu0 0.0
        %912 = vmatpush1.msra.mxu0 0.0
        %913 = vmatprep.subr.mxu0 0.0
        %914 = vmatpush1.msra.mxu0 0.0
        %915 = vmatprep.subr.mxu0 0.0
        %916 = vmatpush1.msra.mxu0 0.0
        %917 = vmatprep.subr.mxu0 0.0
        %918 = vmatpush1.msra.mxu0 0.0
        %919 = vmatprep.subr.mxu0 0.0
        %920 = vmatpush1.msra.mxu0 0.0
        %921 = vmatprep.subr.mxu0 0.0
        %922 = vmatpush1.msra.mxu0 0.0
        %923 = vmatprep.subr.mxu0 0.0
        %924 = vmatpush1.msra.mxu0 0.0
        %925 = vmatprep.subr.mxu0 0.0
        %926 = vmatpush1.msra.mxu0 0.0
        %927 = vmatprep.subr.mxu0 0.0
        %928 = vmatpush1.msra.mxu0 0.0
        %929 = vmatprep.subr.mxu0 0.0
        %930 = vmatpush1.msra.mxu0 0.0
        %931 = vmatprep.subr.mxu0 0.0
        %932 = vmatpush1.msra.mxu0 0.0
        %933 = vmatprep.subr.mxu0 0.0
        %934 = vmatpush1.msra.mxu0 0.0
        %935 = vmatprep.subr.mxu0 0.0
        %936 = vmatpush1.msra.mxu0 0.0
        %937 = vmatprep.subr.mxu0 0.0
        %938 = vmatpush1.msra.mxu0 0.0
        %939 = vmatprep.subr.mxu0 0.0
        %940 = vmatpush1.msra.mxu0 0.0
        %941 = vmatprep.mubr.f32.mxu0 0.0
        %942 = vmatmul.mubr.f32.gmra.mrb[0].mxu0 %v875
        %v943 = vpop.f32.mrb[0].mxu0
        %v944 = vadd.f32 0.0, %v943
        %v945 = vpop.f32.mrb[0].mxu0
        %946 = vdwg.mxu0
        %v947 = vmul.f32 %v944, %v867
        %948 = vst.msk [vmem:[#allocation2] sm:$0xff] %vm776, %v947
        %949 = vrot.lane.b32.xlu0 %v775, 120
        %v950 = vpop.permute.xlu0 %949
        %951 = vrot.lane.b32.xlu0 %v661, 120
        %v952 = vpop.permute.xlu0 %951
        %953 = vrot.lane.b32.xlu0 %v666, 120
        %v954 = vpop.permute.xlu0 %953
        %v955 = vsel %vm776, %v950, 0
        %v957 = vsel %vm776, %v952, 0
        %v959 = vsel %vm776, %v954, 0
        %961 = vmatprep.subr.mxu0 0.0
        %962 = vmatpush1.xpose.msra.mxu0 %v957
        %963 = vmatprep.subr.mxu0 0.0
        %964 = vmatpush1.xpose.msra.mxu0 %v959
        %965 = vmatprep.subr.mxu0 0.0
        %966 = vmatpush1.xpose.msra.mxu0 0.0
        %967 = vmatprep.subr.mxu0 0.0
        %968 = vmatpush1.xpose.msra.mxu0 0.0
        %969 = vmatprep.subr.mxu0 0.0
        %970 = vmatpush1.xpose.msra.mxu0 0.0
        %971 = vmatprep.subr.mxu0 0.0
        %972 = vmatpush1.xpose.msra.mxu0 0.0
        %973 = vmatprep.subr.mxu0 0.0
        %974 = vmatpush1.xpose.msra.mxu0 0.0
        %975 = vmatprep.subr.mxu0 0.0
        %976 = vmatpush1.xpose.msra.mxu0 0.0
        %977 = vmatprep.subr.mxu0 0.0
        %978 = vmatpush1.xpose.msra.mxu0 0.0
        %979 = vmatprep.subr.mxu0 0.0
        %980 = vmatpush1.xpose.msra.mxu0 0.0
        %981 = vmatprep.subr.mxu0 0.0
        %982 = vmatpush1.xpose.msra.mxu0 0.0
        %983 = vmatprep.subr.mxu0 0.0
        %984 = vmatpush1.xpose.msra.mxu0 0.0
        %985 = vmatprep.subr.mxu0 0.0
        %986 = vmatpush1.xpose.msra.mxu0 0.0
        %987 = vmatprep.subr.mxu0 0.0
        %988 = vmatpush1.xpose.msra.mxu0 0.0
        %989 = vmatprep.subr.mxu0 0.0
        %990 = vmatpush1.xpose.msra.mxu0 0.0
        %991 = vmatprep.subr.mxu0 0.0
        %992 = vmatpush1.xpose.msra.mxu0 0.0
        %993 = vmatprep.subr.mxu0 0.0
        %994 = vmatpush1.xpose.msra.mxu0 0.0
        %995 = vmatprep.subr.mxu0 0.0
        %996 = vmatpush1.xpose.msra.mxu0 0.0
        %997 = vmatprep.subr.mxu0 0.0
        %998 = vmatpush1.xpose.msra.mxu0 0.0
        %999 = vmatprep.subr.mxu0 0.0
        %1000 = vmatpush1.xpose.msra.mxu0 0.0
        %1001 = vmatprep.subr.mxu0 0.0
        %1002 = vmatpush1.xpose.msra.mxu0 0.0
        %1003 = vmatprep.subr.mxu0 0.0
        %1004 = vmatpush1.xpose.msra.mxu0 0.0
        %1005 = vmatprep.subr.mxu0 0.0
        %1006 = vmatpush1.xpose.msra.mxu0 0.0
        %1007 = vmatprep.subr.mxu0 0.0
        %1008 = vmatpush1.xpose.msra.mxu0 0.0
        %1009 = vmatprep.subr.mxu0 0.0
        %1010 = vmatpush1.xpose.msra.mxu0 0.0
        %1011 = vmatprep.subr.mxu0 0.0
        %1012 = vmatpush1.xpose.msra.mxu0 0.0
        %1013 = vmatprep.subr.mxu0 0.0
        %1014 = vmatpush1.xpose.msra.mxu0 0.0
        %1015 = vmatprep.subr.mxu0 0.0
        %1016 = vmatpush1.xpose.msra.mxu0 0.0
        %1017 = vmatprep.subr.mxu0 0.0
        %1018 = vmatpush1.xpose.msra.mxu0 0.0
        %1019 = vmatprep.subr.mxu0 0.0
        %1020 = vmatpush1.xpose.msra.mxu0 0.0
        %1021 = vmatprep.subr.mxu0 0.0
        %1022 = vmatpush1.xpose.msra.mxu0 0.0
        %1023 = vmatprep.subr.mxu0 0.0
        %1024 = vmatpush1.xpose.msra.mxu0 0.0
        %1025 = vmatprep.mubr.f32.mxu0 0.0
        %1026 = vmatmul.mubr.f32.gmra.mrb[0].mxu0 %v955
        %v1027 = vpop.f32.mrb[0].mxu0
        %v1028 = vadd.f32 0.0, %v1027
        %v1029 = vpop.f32.mrb[0].mxu0
        %1030 = vdwg.mxu0
        %v1031 = vsel %vm856, %v1028, -inf
        %1032 = vmax.xlane.f32.xlu0 %v1031
        %v1033 = vpop.xlane.xlu0 %1032
        %v1034 = vsub.f32 %v1028, %v1033
        %v1035 = vmul.f32 %v1034, 1.442695
        %v1036 = vpow.pop %v1035
        %v1037 = vsel %vm856, %v1036, 0.0
        %1038 = vadd.xlane.f32.xlu0 %v1037
        %v1039 = vpop.xlane.xlu0 %1038
        %v1040 = vrcp.pop %v1039
        %v1041 = vmul.f32 1.0, %v1040
        %1042 = vrot.lane.b32.xlu0 %v661, 88
        %v1043 = vpop.permute.xlu0 %1042
        %1044 = vrot.lane.b32.xlu0 %v666, 88
        %v1045 = vpop.permute.xlu0 %1044
        %v1049 = vsel %vm856, %v1036, 0
        %1051 = vmatprep.subr.mxu0 0.0
        %1052 = vmatpush1.msra.mxu0 %v1043
        %1053 = vmatprep.subr.mxu0 0.0
        %1054 = vmatpush1.msra.mxu0 %v1045
        %1055 = vmatprep.subr.mxu0 0.0
        %1056 = vmatpush1.msra.mxu0 0.0
        %1057 = vmatprep.subr.mxu0 0.0
        %1058 = vmatpush1.msra.mxu0 0.0
        %1059 = vmatprep.subr.mxu0 0.0
        %1060 = vmatpush1.msra.mxu0 0.0
        %1061 = vmatprep.subr.mxu0 0.0
        %1062 = vmatpush1.msra.mxu0 0.0
        %1063 = vmatprep.subr.mxu0 0.0
        %1064 = vmatpush1.msra.mxu0 0.0
        %1065 = vmatprep.subr.mxu0 0.0
        %1066 = vmatpush1.msra.mxu0 0.0
        %1067 = vmatprep.subr.mxu0 0.0
        %1068 = vmatpush1.msra.mxu0 0.0
        %1069 = vmatprep.subr.mxu0 0.0
        %1070 = vmatpush1.msra.mxu0 0.0
        %1071 = vmatprep.subr.mxu0 0.0
        %1072 = vmatpush1.msra.mxu0 0.0
        %1073 = vmatprep.subr.mxu0 0.0
        %1074 = vmatpush1.msra.mxu0 0.0
        %1075 = vmatprep.subr.mxu0 0.0
        %1076 = vmatpush1.msra.mxu0 0.0
        %1077 = vmatprep.subr.mxu0 0.0
        %1078 = vmatpush1.msra.mxu0 0.0
        %1079 = vmatprep.subr.mxu0 0.0
        %1080 = vmatpush1.msra.mxu0 0.0
        %1081 = vmatprep.subr.mxu0 0.0
        %1082 = vmatpush1.msra.mxu0 0.0
        %1083 = vmatprep.subr.mxu0 0.0
        %1084 = vmatpush1.msra.mxu0 0.0
        %1085 = vmatprep.subr.mxu0 0.0
        %1086 = vmatpush1.msra.mxu0 0.0
        %1087 = vmatprep.subr.mxu0 0.0
        %1088 = vmatpush1.msra.mxu0 0.0
        %1089 = vmatprep.subr.mxu0 0.0
        %1090 = vmatpush1.msra.mxu0 0.0
        %1091 = vmatprep.subr.mxu0 0.0
        %1092 = vmatpush1.msra.mxu0 0.0
        %1093 = vmatprep.subr.mxu0 0.0
        %1094 = vmatpush1.msra.mxu0 0.0
        %1095 = vmatprep.subr.mxu0 0.0
        %1096 = vmatpush1.msra.mxu0 0.0
        %1097 = vmatprep.subr.mxu0 0.0
        %1098 = vmatpush1.msra.mxu0 0.0
        %1099 = vmatprep.subr.mxu0 0.0
        %1100 = vmatpush1.msra.mxu0 0.0
        %1101 = vmatprep.subr.mxu0 0.0
        %1102 = vmatpush1.msra.mxu0 0.0
        %1103 = vmatprep.subr.mxu0 0.0
        %1104 = vmatpush1.msra.mxu0 0.0
        %1105 = vmatprep.subr.mxu0 0.0
        %1106 = vmatpush1.msra.mxu0 0.0
        %1107 = vmatprep.subr.mxu0 0.0
        %1108 = vmatpush1.msra.mxu0 0.0
        %1109 = vmatprep.subr.mxu0 0.0
        %1110 = vmatpush1.msra.mxu0 0.0
        %1111 = vmatprep.subr.mxu0 0.0
        %1112 = vmatpush1.msra.mxu0 0.0
        %1113 = vmatprep.subr.mxu0 0.0
        %1114 = vmatpush1.msra.mxu0 0.0
        %1115 = vmatprep.mubr.f32.mxu0 0.0
        %1116 = vmatmul.mubr.f32.gmra.mrb[0].mxu0 %v1049
        %v1117 = vpop.f32.mrb[0].mxu0
        %v1118 = vadd.f32 0.0, %v1117
        %v1119 = vpop.f32.mrb[0].mxu0
        %1120 = vdwg.mxu0
        %v1121 = vmul.f32 %v1118, %v1041
        %1123 = vrot.lane.b32.xlu0 %v1121, 8
        %v1124 = vpop.permute.xlu0 %1123
        %vm1126 = vcmask 130112
        %1127 = vst.msk [vmem:[#allocation2] sm:$0xff] %vm1126, %v1124
        %1128 = vrot.lane.b32.xlu0 %v775, 112
        %v1129 = vpop.permute.xlu0 %1128
        %1130 = vrot.lane.b32.xlu0 %v661, 112
        %v1131 = vpop.permute.xlu0 %1130
        %1132 = vrot.lane.b32.xlu0 %v666, 112
        %v1133 = vpop.permute.xlu0 %1132
        %v1134 = vsel %vm776, %v1129, 0
        %v1136 = vsel %vm776, %v1131, 0
        %v1138 = vsel %vm776, %v1133, 0
        %1140 = vmatprep.subr.mxu0 0.0
        %1141 = vmatpush1.xpose.msra.mxu0 %v1136
        %1142 = vmatprep.subr.mxu0 0.0
        %1143 = vmatpush1.xpose.msra.mxu0 %v1138
        %1144 = vmatprep.subr.mxu0 0.0
        %1145 = vmatpush1.xpose.msra.mxu0 0.0
        %1146 = vmatprep.subr.mxu0 0.0
        %1147 = vmatpush1.xpose.msra.mxu0 0.0
        %1148 = vmatprep.subr.mxu0 0.0
        %1149 = vmatpush1.xpose.msra.mxu0 0.0
        %1150 = vmatprep.subr.mxu0 0.0
        %1151 = vmatpush1.xpose.msra.mxu0 0.0
        %1152 = vmatprep.subr.mxu0 0.0
        %1153 = vmatpush1.xpose.msra.mxu0 0.0
        %1154 = vmatprep.subr.mxu0 0.0
        %1155 = vmatpush1.xpose.msra.mxu0 0.0
        %1156 = vmatprep.subr.mxu0 0.0
        %1157 = vmatpush1.xpose.msra.mxu0 0.0
        %1158 = vmatprep.subr.mxu0 0.0
        %1159 = vmatpush1.xpose.msra.mxu0 0.0
        %1160 = vmatprep.subr.mxu0 0.0
        %1161 = vmatpush1.xpose.msra.mxu0 0.0
        %1162 = vmatprep.subr.mxu0 0.0
        %1163 = vmatpush1.xpose.msra.mxu0 0.0
        %1164 = vmatprep.subr.mxu0 0.0
        %1165 = vmatpush1.xpose.msra.mxu0 0.0
        %1166 = vmatprep.subr.mxu0 0.0
        %1167 = vmatpush1.xpose.msra.mxu0 0.0
        %1168 = vmatprep.subr.mxu0 0.0
        %1169 = vmatpush1.xpose.msra.mxu0 0.0
        %1170 = vmatprep.subr.mxu0 0.0
        %1171 = vmatpush1.xpose.msra.mxu0 0.0
        %1172 = vmatprep.subr.mxu0 0.0
        %1173 = vmatpush1.xpose.msra.mxu0 0.0
        %1174 = vmatprep.subr.mxu0 0.0
        %1175 = vmatpush1.xpose.msra.mxu0 0.0
        %1176 = vmatprep.subr.mxu0 0.0
        %1177 = vmatpush1.xpose.msra.mxu0 0.0
        %1178 = vmatprep.subr.mxu0 0.0
        %1179 = vmatpush1.xpose.msra.mxu0 0.0
        %1180 = vmatprep.subr.mxu0 0.0
        %1181 = vmatpush1.xpose.msra.mxu0 0.0
        %1182 = vmatprep.subr.mxu0 0.0
        %1183 = vmatpush1.xpose.msra.mxu0 0.0
        %1184 = vmatprep.subr.mxu0 0.0
        %1185 = vmatpush1.xpose.msra.mxu0 0.0
        %1186 = vmatprep.subr.mxu0 0.0
        %1187 = vmatpush1.xpose.msra.mxu0 0.0
        %1188 = vmatprep.subr.mxu0 0.0
        %1189 = vmatpush1.xpose.msra.mxu0 0.0
        %1190 = vmatprep.subr.mxu0 0.0
        %1191 = vmatpush1.xpose.msra.mxu0 0.0
        %1192 = vmatprep.subr.mxu0 0.0
        %1193 = vmatpush1.xpose.msra.mxu0 0.0
        %1194 = vmatprep.subr.mxu0 0.0
        %1195 = vmatpush1.xpose.msra.mxu0 0.0
        %1196 = vmatprep.subr.mxu0 0.0
        %1197 = vmatpush1.xpose.msra.mxu0 0.0
        %1198 = vmatprep.subr.mxu0 0.0
        %1199 = vmatpush1.xpose.msra.mxu0 0.0
        %1200 = vmatprep.subr.mxu0 0.0
        %1201 = vmatpush1.xpose.msra.mxu0 0.0
        %1202 = vmatprep.subr.mxu0 0.0
        %1203 = vmatpush1.xpose.msra.mxu0 0.0
        %1204 = vmatprep.mubr.f32.mxu0 0.0
        %1205 = vmatmul.mubr.f32.gmra.mrb[0].mxu0 %v1134
        %v1206 = vpop.f32.mrb[0].mxu0
        %v1207 = vadd.f32 0.0, %v1206
        %v1208 = vpop.f32.mrb[0].mxu0
        %1209 = vdwg.mxu0
        %v1210 = vsel %vm856, %v1207, -inf
        %1211 = vmax.xlane.f32.xlu0 %v1210
        %v1212 = vpop.xlane.xlu0 %1211
        %v1213 = vsub.f32 %v1207, %v1212
        %v1214 = vmul.f32 %v1213, 1.442695
        %v1215 = vpow.pop %v1214
        %v1216 = vsel %vm856, %v1215, 0.0
        %1217 = vadd.xlane.f32.xlu0 %v1216
        %v1218 = vpop.xlane.xlu0 %1217
        %v1219 = vrcp.pop %v1218
        %v1220 = vmul.f32 1.0, %v1219
        %1221 = vrot.lane.b32.xlu0 %v661, 80
        %v1222 = vpop.permute.xlu0 %1221
        %1223 = vrot.lane.b32.xlu0 %v666, 80
        %v1224 = vpop.permute.xlu0 %1223
        %v1228 = vsel %vm856, %v1215, 0
        %1230 = vmatprep.subr.mxu0 0.0
        %1231 = vmatpush1.msra.mxu0 %v1222
        %1232 = vmatprep.subr.mxu0 0.0
        %1233 = vmatpush1.msra.mxu0 %v1224
        %1234 = vmatprep.subr.mxu0 0.0
        %1235 = vmatpush1.msra.mxu0 0.0
        %1236 = vmatprep.subr.mxu0 0.0
        %1237 = vmatpush1.msra.mxu0 0.0
        %1238 = vmatprep.subr.mxu0 0.0
        %1239 = vmatpush1.msra.mxu0 0.0
        %1240 = vmatprep.subr.mxu0 0.0
        %1241 = vmatpush1.msra.mxu0 0.0
        %1242 = vmatprep.subr.mxu0 0.0
        %1243 = vmatpush1.msra.mxu0 0.0
        %1244 = vmatprep.subr.mxu0 0.0
        %1245 = vmatpush1.msra.mxu0 0.0
        %1246 = vmatprep.subr.mxu0 0.0
        %1247 = vmatpush1.msra.mxu0 0.0
        %1248 = vmatprep.subr.mxu0 0.0
        %1249 = vmatpush1.msra.mxu0 0.0
        %1250 = vmatprep.subr.mxu0 0.0
        %1251 = vmatpush1.msra.mxu0 0.0
        %1252 = vmatprep.subr.mxu0 0.0
        %1253 = vmatpush1.msra.mxu0 0.0
        %1254 = vmatprep.subr.mxu0 0.0
        %1255 = vmatpush1.msra.mxu0 0.0
        %1256 = vmatprep.subr.mxu0 0.0
        %1257 = vmatpush1.msra.mxu0 0.0
        %1258 = vmatprep.subr.mxu0 0.0
        %1259 = vmatpush1.msra.mxu0 0.0
        %1260 = vmatprep.subr.mxu0 0.0
        %1261 = vmatpush1.msra.mxu0 0.0
        %1262 = vmatprep.subr.mxu0 0.0
        %1263 = vmatpush1.msra.mxu0 0.0
        %1264 = vmatprep.subr.mxu0 0.0
        %1265 = vmatpush1.msra.mxu0 0.0
        %1266 = vmatprep.subr.mxu0 0.0
        %1267 = vmatpush1.msra.mxu0 0.0
        %1268 = vmatprep.subr.mxu0 0.0
        %1269 = vmatpush1.msra.mxu0 0.0
        %1270 = vmatprep.subr.mxu0 0.0
        %1271 = vmatpush1.msra.mxu0 0.0
        %1272 = vmatprep.subr.mxu0 0.0
        %1273 = vmatpush1.msra.mxu0 0.0
        %1274 = vmatprep.subr.mxu0 0.0
        %1275 = vmatpush1.msra.mxu0 0.0
        %1276 = vmatprep.subr.mxu0 0.0
        %1277 = vmatpush1.msra.mxu0 0.0
        %1278 = vmatprep.subr.mxu0 0.0
        %1279 = vmatpush1.msra.mxu0 0.0
        %1280 = vmatprep.subr.mxu0 0.0
        %1281 = vmatpush1.msra.mxu0 0.0
        %1282 = vmatprep.subr.mxu0 0.0
        %1283 = vmatpush1.msra.mxu0 0.0
        %1284 = vmatprep.subr.mxu0 0.0
        %1285 = vmatpush1.msra.mxu0 0.0
        %1286 = vmatprep.subr.mxu0 0.0
        %1287 = vmatpush1.msra.mxu0 0.0
        %1288 = vmatprep.subr.mxu0 0.0
        %1289 = vmatpush1.msra.mxu0 0.0
        %1290 = vmatprep.subr.mxu0 0.0
        %1291 = vmatpush1.msra.mxu0 0.0
        %1292 = vmatprep.subr.mxu0 0.0
        %1293 = vmatpush1.msra.mxu0 0.0
        %1294 = vmatprep.mubr.f32.mxu0 0.0
        %1295 = vmatmul.mubr.f32.gmra.mrb[0].mxu0 %v1228
        %v1296 = vpop.f32.mrb[0].mxu0
        %v1297 = vadd.f32 0.0, %v1296
        %v1298 = vpop.f32.mrb[0].mxu0
        %1299 = vdwg.mxu0
        %v1300 = vmul.f32 %v1297, %v1220
        %1302 = vrot.lane.b32.xlu0 %v1300, 16
        %v1303 = vpop.permute.xlu0 %1302
        %vm1305 = vcmask 195712
        %1306 = vst.msk [vmem:[#allocation2] sm:$0xff] %vm1305, %v1303
        %1307 = vrot.lane.b32.xlu0 %v775, 104
        %v1308 = vpop.permute.xlu0 %1307
        %1309 = vrot.lane.b32.xlu0 %v661, 104
        %v1310 = vpop.permute.xlu0 %1309
        %1311 = vrot.lane.b32.xlu0 %v666, 104
        %v1312 = vpop.permute.xlu0 %1311
        %v1313 = vsel %vm776, %v1308, 0
        %v1315 = vsel %vm776, %v1310, 0
        %v1317 = vsel %vm776, %v1312, 0
        %1319 = vmatprep.subr.mxu0 0.0
        %1320 = vmatpush1.xpose.msra.mxu0 %v1315
        %1321 = vmatprep.subr.mxu0 0.0
        %1322 = vmatpush1.xpose.msra.mxu0 %v1317
        %1323 = vmatprep.subr.mxu0 0.0
        %1324 = vmatpush1.xpose.msra.mxu0 0.0
        %1325 = vmatprep.subr.mxu0 0.0
        %1326 = vmatpush1.xpose.msra.mxu0 0.0
        %1327 = vmatprep.subr.mxu0 0.0
        %1328 = vmatpush1.xpose.msra.mxu0 0.0
        %1329 = vmatprep.subr.mxu0 0.0
        %1330 = vmatpush1.xpose.msra.mxu0 0.0
        %1331 = vmatprep.subr.mxu0 0.0
        %1332 = vmatpush1.xpose.msra.mxu0 0.0
        %1333 = vmatprep.subr.mxu0 0.0
        %1334 = vmatpush1.xpose.msra.mxu0 0.0
        %1335 = vmatprep.subr.mxu0 0.0
        %1336 = vmatpush1.xpose.msra.mxu0 0.0
        %1337 = vmatprep.subr.mxu0 0.0
        %1338 = vmatpush1.xpose.msra.mxu0 0.0
        %1339 = vmatprep.subr.mxu0 0.0
        %1340 = vmatpush1.xpose.msra.mxu0 0.0
        %1341 = vmatprep.subr.mxu0 0.0
        %1342 = vmatpush1.xpose.msra.mxu0 0.0
        %1343 = vmatprep.subr.mxu0 0.0
        %1344 = vmatpush1.xpose.msra.mxu0 0.0
        %1345 = vmatprep.subr.mxu0 0.0
        %1346 = vmatpush1.xpose.msra.mxu0 0.0
        %1347 = vmatprep.subr.mxu0 0.0
        %1348 = vmatpush1.xpose.msra.mxu0 0.0
        %1349 = vmatprep.subr.mxu0 0.0
        %1350 = vmatpush1.xpose.msra.mxu0 0.0
        %1351 = vmatprep.subr.mxu0 0.0
        %1352 = vmatpush1.xpose.msra.mxu0 0.0
        %1353 = vmatprep.subr.mxu0 0.0
        %1354 = vmatpush1.xpose.msra.mxu0 0.0
        %1355 = vmatprep.subr.mxu0 0.0
        %1356 = vmatpush1.xpose.msra.mxu0 0.0
        %1357 = vmatprep.subr.mxu0 0.0
        %1358 = vmatpush1.xpose.msra.mxu0 0.0
        %1359 = vmatprep.subr.mxu0 0.0
        %1360 = vmatpush1.xpose.msra.mxu0 0.0
        %1361 = vmatprep.subr.mxu0 0.0
        %1362 = vmatpush1.xpose.msra.mxu0 0.0
        %1363 = vmatprep.subr.mxu0 0.0
        %1364 = vmatpush1.xpose.msra.mxu0 0.0
        %1365 = vmatprep.subr.mxu0 0.0
        %1366 = vmatpush1.xpose.msra.mxu0 0.0
        %1367 = vmatprep.subr.mxu0 0.0
        %1368 = vmatpush1.xpose.msra.mxu0 0.0
        %1369 = vmatprep.subr.mxu0 0.0
        %1370 = vmatpush1.xpose.msra.mxu0 0.0
        %1371 = vmatprep.subr.mxu0 0.0
        %1372 = vmatpush1.xpose.msra.mxu0 0.0
        %1373 = vmatprep.subr.mxu0 0.0
        %1374 = vmatpush1.xpose.msra.mxu0 0.0
        %1375 = vmatprep.subr.mxu0 0.0
        %1376 = vmatpush1.xpose.msra.mxu0 0.0
        %1377 = vmatprep.subr.mxu0 0.0
        %1378 = vmatpush1.xpose.msra.mxu0 0.0
        %1379 = vmatprep.subr.mxu0 0.0
        %1380 = vmatpush1.xpose.msra.mxu0 0.0
        %1381 = vmatprep.subr.mxu0 0.0
        %1382 = vmatpush1.xpose.msra.mxu0 0.0
        %1383 = vmatprep.mubr.f32.mxu0 0.0
        %1384 = vmatmul.mubr.f32.gmra.mrb[0].mxu0 %v1313
        %v1385 = vpop.f32.mrb[0].mxu0
        %v1386 = vadd.f32 0.0, %v1385
        %v1387 = vpop.f32.mrb[0].mxu0
        %1388 = vdwg.mxu0
        %v1389 = vsel %vm856, %v1386, -inf
        %1390 = vmax.xlane.f32.xlu0 %v1389
        %v1391 = vpop.xlane.xlu0 %1390
        %v1392 = vsub.f32 %v1386, %v1391
        %v1393 = vmul.f32 %v1392, 1.442695
        %v1394 = vpow.pop %v1393
        %v1395 = vsel %vm856, %v1394, 0.0
        %1396 = vadd.xlane.f32.xlu0 %v1395
        %v1397 = vpop.xlane.xlu0 %1396
        %v1398 = vrcp.pop %v1397
        %v1399 = vmul.f32 1.0, %v1398
        %1400 = vrot.lane.b32.xlu0 %v661, 72
        %v1401 = vpop.permute.xlu0 %1400
        %1402 = vrot.lane.b32.xlu0 %v666, 72
        %v1403 = vpop.permute.xlu0 %1402
        %v1407 = vsel %vm856, %v1394, 0
        %1409 = vmatprep.subr.mxu0 0.0
        %1410 = vmatpush1.msra.mxu0 %v1401
        %1411 = vmatprep.subr.mxu0 0.0
        %1412 = vmatpush1.msra.mxu0 %v1403
        %1413 = vmatprep.subr.mxu0 0.0
        %1414 = vmatpush1.msra.mxu0 0.0
        %1415 = vmatprep.subr.mxu0 0.0
        %1416 = vmatpush1.msra.mxu0 0.0
        %1417 = vmatprep.subr.mxu0 0.0
        %1418 = vmatpush1.msra.mxu0 0.0
        %1419 = vmatprep.subr.mxu0 0.0
        %1420 = vmatpush1.msra.mxu0 0.0
        %1421 = vmatprep.subr.mxu0 0.0
        %1422 = vmatpush1.msra.mxu0 0.0
        %1423 = vmatprep.subr.mxu0 0.0
        %1424 = vmatpush1.msra.mxu0 0.0
        %1425 = vmatprep.subr.mxu0 0.0
        %1426 = vmatpush1.msra.mxu0 0.0
        %1427 = vmatprep.subr.mxu0 0.0
        %1428 = vmatpush1.msra.mxu0 0.0
        %1429 = vmatprep.subr.mxu0 0.0
        %1430 = vmatpush1.msra.mxu0 0.0
        %1431 = vmatprep.subr.mxu0 0.0
        %1432 = vmatpush1.msra.mxu0 0.0
        %1433 = vmatprep.subr.mxu0 0.0
        %1434 = vmatpush1.msra.mxu0 0.0
        %1435 = vmatprep.subr.mxu0 0.0
        %1436 = vmatpush1.msra.mxu0 0.0
        %1437 = vmatprep.subr.mxu0 0.0
        %1438 = vmatpush1.msra.mxu0 0.0
        %1439 = vmatprep.subr.mxu0 0.0
        %1440 = vmatpush1.msra.mxu0 0.0
        %1441 = vmatprep.subr.mxu0 0.0
        %1442 = vmatpush1.msra.mxu0 0.0
        %1443 = vmatprep.subr.mxu0 0.0
        %1444 = vmatpush1.msra.mxu0 0.0
        %1445 = vmatprep.subr.mxu0 0.0
        %1446 = vmatpush1.msra.mxu0 0.0
        %1447 = vmatprep.subr.mxu0 0.0
        %1448 = vmatpush1.msra.mxu0 0.0
        %1449 = vmatprep.subr.mxu0 0.0
        %1450 = vmatpush1.msra.mxu0 0.0
        %1451 = vmatprep.subr.mxu0 0.0
        %1452 = vmatpush1.msra.mxu0 0.0
        %1453 = vmatprep.subr.mxu0 0.0
        %1454 = vmatpush1.msra.mxu0 0.0
        %1455 = vmatprep.subr.mxu0 0.0
        %1456 = vmatpush1.msra.mxu0 0.0
        %1457 = vmatprep.subr.mxu0 0.0
        %1458 = vmatpush1.msra.mxu0 0.0
        %1459 = vmatprep.subr.mxu0 0.0
        %1460 = vmatpush1.msra.mxu0 0.0
        %1461 = vmatprep.subr.mxu0 0.0
        %1462 = vmatpush1.msra.mxu0 0.0
        %1463 = vmatprep.subr.mxu0 0.0
        %1464 = vmatpush1.msra.mxu0 0.0
        %1465 = vmatprep.subr.mxu0 0.0
        %1466 = vmatpush1.msra.mxu0 0.0
        %1467 = vmatprep.subr.mxu0 0.0
        %1468 = vmatpush1.msra.mxu0 0.0
        %1469 = vmatprep.subr.mxu0 0.0
        %1470 = vmatpush1.msra.mxu0 0.0
        %1471 = vmatprep.subr.mxu0 0.0
        %1472 = vmatpush1.msra.mxu0 0.0
        %1473 = vmatprep.mubr.f32.mxu0 0.0
        %1474 = vmatmul.mubr.f32.gmra.mrb[0].mxu0 %v1407
        %v1475 = vpop.f32.mrb[0].mxu0
        %v1476 = vadd.f32 0.0, %v1475
        %v1477 = vpop.f32.mrb[0].mxu0
        %1478 = vdwg.mxu0
        %v1479 = vmul.f32 %v1476, %v1399
        %1481 = vrot.lane.b32.xlu0 %v1479, 24
        %v1482 = vpop.permute.xlu0 %1481
        %vm1484 = vcmask 261312
        %1485 = vst.msk [vmem:[#allocation2] sm:$0xff] %vm1484, %v1482
        %v1486 = vld [vmem:[#allocation2] sm:$0xff]
        %v1487 = vld [vmem:[#allocation16] sm:$0xff]
        %v1488 = vld [vmem:[#allocation16 + $0x8] sm:$0xff]
        %v1489 = vld [vmem:[#allocation16 + $0x10] sm:$0xff]
        %v1490 = vld [vmem:[#allocation16 + $0x18] sm:$0xff]
        %v1491 = vld [vmem:[#allocation17] sm:$0x1]
        %v1493 = vlaneseq
        %v1494 = vshrl.u32 %v1493, 7
        %v1495 = vsub.s32 0, %v1494
        %v1496 = vrot.slane %v1491, %v1495
        %v1499 = vsel %vm540, %v1486, 0
        %1501 = vmatprep.subr.mxu0 0.0
        %1502 = vmatpush1.msra.mxu0 %v1487
        %1503 = vmatprep.subr.mxu0 0.0
        %1504 = vmatpush1.msra.mxu0 %v1488
        %1505 = vmatprep.subr.mxu0 0.0
        %1506 = vmatpush1.msra.mxu0 %v1489
        %1507 = vmatprep.subr.mxu0 0.0
        %1508 = vmatpush1.msra.mxu0 %v1490
        %1509 = vmatprep.subr.mxu0 0.0
        %1510 = vmatpush1.msra.mxu0 0.0
        %1511 = vmatprep.subr.mxu0 0.0
        %1512 = vmatpush1.msra.mxu0 0.0
        %1513 = vmatprep.subr.mxu0 0.0
        %1514 = vmatpush1.msra.mxu0 0.0
        %1515 = vmatprep.subr.mxu0 0.0
        %1516 = vmatpush1.msra.mxu0 0.0
        %1517 = vmatprep.subr.mxu0 0.0
        %1518 = vmatpush1.msra.mxu0 0.0
        %1519 = vmatprep.subr.mxu0 0.0
        %1520 = vmatpush1.msra.mxu0 0.0
        %1521 = vmatprep.subr.mxu0 0.0
        %1522 = vmatpush1.msra.mxu0 0.0
        %1523 = vmatprep.subr.mxu0 0.0
        %1524 = vmatpush1.msra.mxu0 0.0
        %1525 = vmatprep.subr.mxu0 0.0
        %1526 = vmatpush1.msra.mxu0 0.0
        %1527 = vmatprep.subr.mxu0 0.0
        %1528 = vmatpush1.msra.mxu0 0.0
        %1529 = vmatprep.subr.mxu0 0.0
        %1530 = vmatpush1.msra.mxu0 0.0
        %1531 = vmatprep.subr.mxu0 0.0
        %1532 = vmatpush1.msra.mxu0 0.0
        %1533 = vmatprep.subr.mxu0 0.0
        %1534 = vmatpush1.msra.mxu0 0.0
        %1535 = vmatprep.subr.mxu0 0.0
        %1536 = vmatpush1.msra.mxu0 0.0
        %1537 = vmatprep.subr.mxu0 0.0
        %1538 = vmatpush1.msra.mxu0 0.0
        %1539 = vmatprep.subr.mxu0 0.0
        %1540 = vmatpush1.msra.mxu0 0.0
        %1541 = vmatprep.subr.mxu0 0.0
        %1542 = vmatpush1.msra.mxu0 0.0
        %1543 = vmatprep.subr.mxu0 0.0
        %1544 = vmatpush1.msra.mxu0 0.0
        %1545 = vmatprep.subr.mxu0 0.0
        %1546 = vmatpush1.msra.mxu0 0.0
        %1547 = vmatprep.subr.mxu0 0.0
        %1548 = vmatpush1.msra.mxu0 0.0
        %1549 = vmatprep.subr.mxu0 0.0
        %1550 = vmatpush1.msra.mxu0 0.0
        %1551 = vmatprep.subr.mxu0 0.0
        %1552 = vmatpush1.msra.mxu0 0.0
        %1553 = vmatprep.subr.mxu0 0.0
        %1554 = vmatpush1.msra.mxu0 0.0
        %1555 = vmatprep.subr.mxu0 0.0
        %1556 = vmatpush1.msra.mxu0 0.0
        %1557 = vmatprep.subr.mxu0 0.0
        %1558 = vmatpush1.msra.mxu0 0.0
        %1559 = vmatprep.subr.mxu0 0.0
        %1560 = vmatpush1.msra.mxu0 0.0
        %1561 = vmatprep.subr.mxu0 0.0
        %1562 = vmatpush1.msra.mxu0 0.0
        %1563 = vmatprep.subr.mxu0 0.0
        %1564 = vmatpush1.msra.mxu0 0.0
        %1565 = vmatprep.mubr.f32.mxu0 0.0
        %1566 = vmatmul.mubr.f32.gmra.mrb[0].mxu0 %v1499
        %v1567 = vpop.f32.mrb[0].mxu0
        %v1568 = vadd.f32 %v1496, %v1567
        %v1569 = vpop.f32.mrb[0].mxu0
        %1570 = vdwg.mxu0
        %v1571 = vadd.f32 %v535, %v1568
        %1572 = vst.msk [vmem:[%s534] sm:$0xff] %vm540, %v1571
        %s1573 = sand.u32 %s275, 1
        %s1574 = scalar_lea.sflag [#allocation5], %s1573
        %s1575 = sand.u32 %s275, 1
        %s1576 = smul.addr %s1575, 8
        %s1577 = scalar_lea.vmem [#allocation19], %s1576
        // Predicated region
        $region101: #{decoder_fuser_pallas.4} parent=59 // pred_check
          %p1578 = pneg %p285
        $region102: #{decoder_fuser_pallas.4} parent=59 // pred_check_branch
          %1580 = sbr.rel (%p1578) target = $region104
        $region103: #{decoder_fuser_pallas.4} parent=59 // pred_region
          %s1582 = ssub.s32 128, 128
          %1583 = vsyncadd %s1574, %s1582
          %s1584 = sadd.s32 %s36, %s35
          %s1585 = smul.addr %s1584, 128
          %s1586 = scalar_lea.hbm %s10, %s1585
          %s1588 = sshll.u32 %s1577, 4
          %s1589 = int_to_ptr.vmem [resolvable:$true] %s1588
          %1591 = dma.vmem_to_hbm [thread:$0]  %s1589, 128, %s1586, %s1574
        $region104: #{decoder_fuser_pallas.4} parent=59 // pred_fallthru
          _
      $region60: #{decoder_fuser_pallas.4} parent=5 // pred_fallthru
        _
      %p1592 = scmp.le.s32.totalorder 2, %s26
      // Predicated region
      $region105: #{decoder_fuser_pallas.4} parent=5 // pred_check
        %p1593 = pneg %p1592
      $region106: #{decoder_fuser_pallas.4} parent=5 // pred_check_branch
        %1595 = sbr.rel (%p1593) target = $region108
      $region107: #{decoder_fuser_pallas.4} parent=5 // pred_region
        %s1596 = ssub.s32 %s26, 2
        // Predicated region
        $region109: #{decoder_fuser_pallas.4} parent=107 // pred_check
          %p1597 = pneg %p291
        $region110: #{decoder_fuser_pallas.4} parent=107 // pred_check_branch
          %1599 = sbr.rel (%p1597) target = $region112
        $region111: #{decoder_fuser_pallas.4} parent=107 // pred_region
          %s1600 = sand.u32 %s276, 1
          %s1601 = scalar_lea.sflag [#allocation5], %s1600
          %s1602 = sand.u32 %s276, 1
          %s1603 = smul.addr %s1602, 8
          %s1604 = scalar_lea.vmem [#allocation19], %s1603
          %1605 = dma.done %s1601, 128
        $region112: #{decoder_fuser_pallas.4} parent=107 // pred_fallthru
          _
      $region108: #{decoder_fuser_pallas.4} parent=5 // pred_fallthru
        _
    $region6: #{decoder_fuser_pallas.4} parent=1 // loop_footer
      %s30 = sadd.s32 1, %s26
    $region7: #{decoder_fuser_pallas.4} parent=1 // loop_footer_branch
      %25 = sbr.rel target = $region3
    $region8: #{decoder_fuser_pallas.4} parent=1 // loop_exit
      _
    %1606 = vsyncpa [#allocation4], 1
    %s1607 = scalar_lea.sflag [#allocation4], 1
    %1608 = vsyncpa %s1607, 1
    %1609 = vsyncpa [#allocation7], 1
    %1610 = vsyncpa [#allocation10], 1
    %1611 = vsyncpa [#allocation15], 1
    %1612 = vsyncpa [#allocation18], 1
    %1613 = vsyncpa [#allocation5], 1
    %s1614 = scalar_lea.sflag [#allocation5], 1
    %1615 = vsyncpa %s1614, 1

</llo_original>
